<compile_context>
chip_gen: v5e
topology: v5e:2x2
jax: 0.10.0
libtpu: 0.0.40
codegen_flags: <defaults>
</compile_context>

<pallas_src>
import numpy as np
import jax
import jax.numpy as jnp
from jax.experimental import pallas as pl
from jax.experimental.pallas import tpu as pltpu


LANE = 128
MXU_DTYPE = jnp.bfloat16                    # MXU input dtype (accumulation stays f32)
_VMEM_TILE_BUDGET_BYTES = 14 * 1024 * 1024  # plan row tiles against this working budget
_VMEM_LIMIT_BYTES = 32 * 1024 * 1024        # scoped-VMEM limit handed to Mosaic


def _round_up(x, m):
    return (x + m - 1) // m * m


# --------------------------------------------------------------------------- kernels
def _matmul_bn_relu_kernel(p_ref, w_ref, scale_ref, shift_ref, o_ref):
    """Fused conv-as-matmul: (patches @ W) * scale + shift, then ReLU.

    p_ref:(tile_rows, Kpad) bf16, w_ref:(Kpad, Cpad) bf16, scale/shift:(1, Cpad) f32,
    o_ref:(tile_rows, Cpad) f32 -- Cpad is a multiple of 128 so the store is lane-dense.
    """
    acc = jnp.dot(p_ref[...], w_ref[...], preferred_element_type=jnp.float32)
    y = acc * scale_ref[...] + shift_ref[...]          # (1, Cpad) broadcasts over rows
    o_ref[...] = jnp.maximum(y, 0.0).astype(o_ref.dtype)


def _spatial_softmax_kernel(f_ref, px_ref, py_ref, o_ref):
    """Softmax over the HW (sublane) axis + expected x/y coordinates.

    f_ref:(1, HW, Cpad) f32 (channels on lanes), px/py:(1, HW, 1) f32,
    o_ref:(1, 2, Cpad) f32.  One reciprocal per (N, C) row instead of an HW-wide divide.
    """
    f = f_ref[...].astype(jnp.float32)
    m = jnp.max(f, axis=1, keepdims=True)              # (1, 1, Cpad)
    e = jnp.exp(f - m)                                  # (1, HW, Cpad)
    s = jnp.sum(e, axis=1, keepdims=True)               # (1, 1, Cpad)
    ex = jnp.sum(e * px_ref[...], axis=1, keepdims=True)
    ey = jnp.sum(e * py_ref[...], axis=1, keepdims=True)
    inv = pl.reciprocal(s, approx=True)                 # EUP slot, essentially free
    o_ref[:, 0:1, :] = (ex * inv).astype(o_ref.dtype)
    o_ref[:, 1:2, :] = (ey * inv).astype(o_ref.dtype)


# --------------------------------------------------------------------------- wrappers
def _extract_patches_nhwc(x_nhwc, kh, kw, stride, cin_real):
    """im2col: (N,H,W,C>=cin_real) -> (N*Ho*Wo, kh*kw*cin_real).

    Pure data movement (static lax.slice's).  Only the first cin_real channels of a
    possibly lane-padded activation are read.  With allow_input_fusion on the pallas_call
    this chain can fuse into the operand DMA instead of materializing in HBM.
    """
    n, h, w, _ = x_nhwc.shape
    ho = (h - kh) // stride + 1
    wo = (w - kw) // stride + 1
    cols = []
    for i in range(kh):
        for j in range(kw):
            sl = jax.lax.slice(
                x_nhwc,
                (0, i, j, 0),
                (n, i + stride * (ho - 1) + 1, j + stride * (wo - 1) + 1, cin_real),
                (1, stride, stride, 1),
            )
            cols.append(sl)                            # (N, Ho, Wo, cin_real)
    patches = jnp.concatenate(cols, axis=-1)           # (N, Ho, Wo, kh*kw*cin_real)
    return patches.reshape(n * ho * wo, kh * kw * cin_real), (n, ho, wo)


def _pick_tile_rows(r, k_pad, cout_pad):
    """K/Cout-aware row tile: fit the VMEM budget, multiple of 8, and >=2 grid steps."""
    bytes_per_row = 2 * (k_pad * 2 + cout_pad * 4)          # double-buffered bf16 patches + f32 out
    fixed = 2 * (k_pad * cout_pad * 2 + 2 * cout_pad * 4)   # weight + scale/shift blocks
    avail = max(_VMEM_TILE_BUDGET_BYTES - fixed, 64 * 1024)
    t = max(8, min(avail // bytes_per_row, 2048) // 8 * 8)
    if r > 8:
        # Guarantee >= 2 grid steps so both v7x TensorCores get work under "parallel".
        t = min(t, _round_up((r + 1) // 2, 8))
    return int(min(t, r))


def conv_bn_relu_pallas(x_nhwc, w_oihw, b, gamma, beta, mean, var, *, stride, eps=1e-5):
    n, h, w, c_avail = x_nhwc.shape
    cout, cin, kh, kw = w_oihw.shape
    assert cin <= c_avail
    patches, (_, ho, wo) = _extract_patches_nhwc(x_nhwc, kh, kw, stride, cin)
    r, k = patches.shape

    # Pad K to a multiple of 32 (sublane / bf16 packing) and Cout to a full 128-lane vreg
    # (lane-dense stores + full-width MXU columns).  Padded output channels stay zero
    # (zero weight columns, zero scale/shift) and survive ReLU as zeros.
    k_pad = _round_up(k, 32)
    cout_pad = _round_up(cout, LANE)

    # Weight layout: flattened patch index is ((i*kw + j)*Cin + ci).
    wmat = jnp.transpose(w_oihw, (2, 3, 1, 0)).reshape(k, cout)
    wmat = jnp.pad(wmat, ((0, k_pad - k), (0, cout_pad - cout))).astype(MXU_DTYPE)
    if k_pad != k:
        patches = jnp.pad(patches, ((0, 0), (0, k_pad - k)))
    patches = patches.astype(MXU_DTYPE)

    # Fold conv bias + BatchNorm (inference form) into a per-channel scale / shift.
    scale_real = (gamma / jnp.sqrt(var + eps)).astype(jnp.float32)
    shift_real = (beta + (b - mean) * scale_real).astype(jnp.float32)
    scale = jnp.pad(scale_real, (0, cout_pad - cout)).reshape(1, cout_pad)
    shift = jnp.pad(shift_real, (0, cout_pad - cout)).reshape(1, cout_pad)

    tile_rows = _pick_tile_rows(r, k_pad, cout_pad)
    grid = (pl.cdiv(r, tile_rows),)

    out = pl.pallas_call(
        _matmul_bn_relu_kernel,
        out_shape=jax.ShapeDtypeStruct((r, cout_pad), jnp.float32),
        grid_spec=pltpu.PrefetchScalarGridSpec(
            num_scalar_prefetch=0,
            grid=grid,
            in_specs=[
                pl.BlockSpec((tile_rows, k_pad), lambda i: (i, 0)),
                pl.BlockSpec((k_pad, cout_pad), lambda i: (0, 0)),
                pl.BlockSpec((1, cout_pad), lambda i: (0, 0)),
                pl.BlockSpec((1, cout_pad), lambda i: (0, 0)),
            ],
            out_specs=pl.BlockSpec((tile_rows, cout_pad), lambda i: (i, 0)),
        ),
        compiler_params=pltpu.CompilerParams(
            dimension_semantics=("parallel",),
            vmem_limit_bytes=_VMEM_LIMIT_BYTES,
            # Allow the im2col slice/concat/cast producer to fuse into the patch operand DMA.
            allow_input_fusion=[True, False, False, False],
        ),
    )(patches, wmat, scale, shift)
    return out.reshape(n, ho, wo, cout_pad), cout


def _make_pos(height, width):
    # Reproduces the PyTorch SpatialSoftmax buffer construction verbatim (same np.meshgrid
    # argument order + reshape).  Note: for non-square maps PyTorch's own construction yields
    # transposed-looking grids; we match the module's behavior exactly, not "fix" it.
    pos_x, pos_y = np.meshgrid(np.linspace(-1.0, 1.0, height),
                               np.linspace(-1.0, 1.0, width))
    pos_x = pos_x.reshape(height * width).astype(np.float32)
    pos_y = pos_y.reshape(height * width).astype(np.float32)
    return jnp.asarray(pos_x), jnp.asarray(pos_y)


def spatial_softmax_pallas(feat_nhwc_flat, pos_x, pos_y, c_real):
    """feat_nhwc_flat: (N, HW, Cpad) with channels on lanes (no transpose needed)."""
    n, hw, cpad = feat_nhwc_flat.shape
    px = pos_x.reshape(1, hw, 1)
    py = pos_y.reshape(1, hw, 1)
    out = pl.pallas_call(
        _spatial_softmax_kernel,
        out_shape=jax.ShapeDtypeStruct((n, 2, cpad), jnp.float32),
        grid_spec=pltpu.PrefetchScalarGridSpec(
            num_scalar_prefetch=0,
            grid=(n,),
            in_specs=[
                pl.BlockSpec((1, hw, cpad), lambda i: (i, 0, 0)),
                pl.BlockSpec((1, hw, 1), lambda i: (0, 0, 0)),
                pl.BlockSpec((1, hw, 1), lambda i: (0, 0, 0)),
            ],
            out_specs=pl.BlockSpec((1, 2, cpad), lambda i: (i, 0, 0)),
        ),
        compiler_params=pltpu.CompilerParams(
            dimension_semantics=("parallel",),
            vmem_limit_bytes=_VMEM_LIMIT_BYTES,
        ),
    )(feat_nhwc_flat, px, py)
    # Drop padded channels once, at the very end: (N, 2, Cpad) -> (N, 2*c_real)
    # (ordering matches torch.cat([expected_x, expected_y], dim=1)).
    return out[:, :, :c_real].reshape(n, 2 * c_real)


def convnet_forward(x, layer_params, strides, *, eps=1e-5):
    """ConvNet (default flags) forward: [conv->BN->ReLU]*L then SpatialSoftmax."""
    if x.ndim == 3:                                    # mirrors x.unsqueeze(1)
        x = x[:, None, :, :]
    h = jnp.transpose(x, (0, 2, 3, 1))                 # NCHW -> NHWC once (channels on lanes)
    c_real = h.shape[-1]
    for (wgt, b, gamma, beta, mean, var), s in zip(layer_params, strides):
        h, c_real = conv_bn_relu_pallas(h, wgt, b, gamma, beta, mean, var, stride=s, eps=eps)
    n, ho, wo, cpad = h.shape
    feat = h.reshape(n, ho * wo, cpad)                 # free reshape, no transpose
    pos_x, pos_y = _make_pos(ho, wo)
    return spatial_softmax_pallas(feat, pos_x, pos_y, c_real)


# --------------------------------------------------------------------------- reference
def _reference_forward(x, layer_params, strides, *, eps=1e-5):
    h = x.astype(jnp.float32)
    if h.ndim == 3:
        h = h[:, None, :, :]
    for (wgt, b, gamma, beta, mean, var), s in zip(layer_params, strides):
        h = jax.lax.conv_general_dilated(
            h, wgt, window_strides=(s, s), padding="VALID",
            dimension_numbers=("NCHW", "OIHW", "NCHW"))
        h = h + b[None, :, None, None]
        inv = (gamma / jnp.sqrt(var + eps))[None, :, None, None]
        h = (h - mean[None, :, None, None]) * inv + beta[None, :, None, None]
        h = jnp.maximum(h, 0.0)
    n, c, ho, wo = h.shape
    f = h.reshape(n, c, ho * wo)
    sm = jax.nn.softmax(f, axis=-1)
    px, py = _make_pos(ho, wo)
    ex = jnp.sum(px[None, None, :] * sm, axis=2)
    ey = jnp.sum(py[None, None, :] * sm, axis=2)
    return jnp.concatenate([ex, ey], axis=1)


if __name__ == "__main__":
    key = jax.random.PRNGKey(0)
    k_x, k_l1, k_l2 = jax.random.split(key, 3)

    # ConvNet defaults: input_n_channel=1, kernel_size=[5,3], stride=[2,1],
    # output_n_channel=[16,32], use_bn=True, use_sm=True. Small demo: img_size=16.
    x = jax.random.normal(k_x, (2, 1, 16, 16), dtype=jnp.float32)

    def make_layer(k, cin, cout, ksz):
        ks = jax.random.split(k, 6)
        fan_in = cin * ksz * ksz
        wgt = jax.random.normal(ks[0], (cout, cin, ksz, ksz), jnp.float32) / np.sqrt(fan_in)
        b = 0.1 * jax.random.normal(ks[1], (cout,), jnp.float32)
        gamma = 1.0 + 0.1 * jax.random.normal(ks[2], (cout,), jnp.float32)
        beta = 0.1 * jax.random.normal(ks[3], (cout,), jnp.float32)
        mean = 0.1 * jax.random.normal(ks[4], (cout,), jnp.float32)
        var = 1.0 + 0.1 * jax.random.uniform(ks[5], (cout,), jnp.float32)
        return wgt, b, gamma, beta, mean, var

    layer_params = [make_layer(k_l1, 1, 16, 5), make_layer(k_l2, 16, 32, 3)]
    strides = (2, 1)

    fwd = jax.jit(lambda xx: convnet_forward(xx, layer_params, strides))
    y = fwd(x)
    jax.block_until_ready(y)

    # Output dim = output_n_channel[-1] * 2 (SpatialSoftmax head).
    assert y.shape == (2, 64), y.shape
    ref = _reference_forward(x, layer_params, strides)
    # Tolerance accounts for bf16 MXU inputs (f32 accumulation) and the EUP approximate
    # reciprocal in the softmax head; real bugs produce errors orders of magnitude larger.
    assert jnp.allclose(y, ref, atol=3e-2, rtol=3e-2), float(jnp.max(jnp.abs(y - ref)))

    print("KERNEL_OK")
</pallas_src>

<mosaic_0001>
module attributes {stable_mosaic.version = 11 : i64} {
  func.func @_matmul_bn_relu_kernel(%arg0: i32, %arg1: memref<40x32xbf16, #tpu.memory_space<vmem>>, %arg2: memref<32x128xbf16, #tpu.memory_space<vmem>>, %arg3: memref<1x128xf32, #tpu.memory_space<vmem>>, %arg4: memref<1x128xf32, #tpu.memory_space<vmem>>, %arg5: memref<40x128xf32, #tpu.memory_space<vmem>>) attributes {dimension_semantics = [#tpu.dimension_semantics<parallel>], iteration_bounds = array<i64: 2>, scalar_prefetch = 0 : i64, scratch_operands = 0 : i64, tpu.core_type = #tpu.core_type<tc>, window_params = [{transform_indices = @transform_0, window_bounds = array<i64: 40, 32>}, {pipeline_mode = #tpu.pipeline_mode<synchronous>, transform_indices = @transform_1, window_bounds = array<i64: 32, 128>}, {pipeline_mode = #tpu.pipeline_mode<synchronous>, transform_indices = @transform_2, window_bounds = array<i64: 1, 128>}, {pipeline_mode = #tpu.pipeline_mode<synchronous>, transform_indices = @transform_3, window_bounds = array<i64: 1, 128>}, {transform_indices = @transform_4, window_bounds = array<i64: 40, 128>}]} {
    %c0 = arith.constant 0 : index
    %c0_0 = arith.constant 0 : index
    %0 = vector.load %arg1[%c0, %c0_0] : memref<40x32xbf16, #tpu.memory_space<vmem>>, vector<40x32xbf16>
    %c0_1 = arith.constant 0 : index
    %c0_2 = arith.constant 0 : index
    %1 = vector.load %arg2[%c0_1, %c0_2] : memref<32x128xbf16, #tpu.memory_space<vmem>>, vector<32x128xbf16>
    %cst = arith.constant dense<0.000000e+00> : vector<40x128xf32>
    %2 = tpu.matmul %0, %1, %cst {dimension_numbers = #tpu.dot_dimension_numbers<[1], [0], [0], [1], [0, 0, 1, 1], [], []>} : vector<40x32xbf16>, vector<32x128xbf16>, vector<40x128xf32> -> vector<40x128xf32>
    %c0_3 = arith.constant 0 : index
    %c0_4 = arith.constant 0 : index
    %3 = vector.load %arg3[%c0_3, %c0_4] : memref<1x128xf32, #tpu.memory_space<vmem>>, vector<1x128xf32>
    %4 = vector.broadcast %3 : vector<1x128xf32> to vector<40x128xf32>
    %5 = arith.mulf %2, %4 : vector<40x128xf32>
    %c0_5 = arith.constant 0 : index
    %c0_6 = arith.constant 0 : index
    %6 = vector.load %arg4[%c0_5, %c0_6] : memref<1x128xf32, #tpu.memory_space<vmem>>, vector<1x128xf32>
    %7 = vector.broadcast %6 : vector<1x128xf32> to vector<40x128xf32>
    %8 = arith.addf %5, %7 : vector<40x128xf32>
    %cst_7 = arith.constant 0.000000e+00 : f32
    %9 = vector.broadcast %cst_7 : f32 to vector<40x128xf32>
    %10 = arith.maximumf %8, %9 : vector<40x128xf32>
    %c0_8 = arith.constant 0 : index
    %c0_9 = arith.constant 0 : index
    %11 = vector.load %arg5[%c0_8, %c0_9] : memref<40x128xf32, #tpu.memory_space<vmem>>, vector<40x128xf32>
    tpu.vector_store %arg5[%c0_8, %c0_9], %10 {strides = array<i32>} : memref<40x128xf32, #tpu.memory_space<vmem>>, vector<40x128xf32>,
    return
  }
  func.func @transform_0(%arg0: i32) -> (i32, i32) {
    %c0_i32 = arith.constant 0 : i32
    %c0_i32_0 = arith.constant 0 : i32
    return %arg0, %c0_i32 : i32, i32
  }
  func.func @transform_1(%arg0: i32) -> (i32, i32) {
    %c0_i32 = arith.constant 0 : i32
    %c0_i32_0 = arith.constant 0 : i32
    %c0_i32_1 = arith.constant 0 : i32
    return %c0_i32, %c0_i32_0 : i32, i32
  }
  func.func @transform_2(%arg0: i32) -> (i32, i32) {
    %c0_i32 = arith.constant 0 : i32
    %c0_i32_0 = arith.constant 0 : i32
    %c0_i32_1 = arith.constant 0 : i32
    return %c0_i32, %c0_i32_0 : i32, i32
  }
  func.func @transform_3(%arg0: i32) -> (i32, i32) {
    %c0_i32 = arith.constant 0 : i32
    %c0_i32_0 = arith.constant 0 : i32
    %c0_i32_1 = arith.constant 0 : i32
    return %c0_i32, %c0_i32_0 : i32, i32
  }
  func.func @transform_4(%arg0: i32) -> (i32, i32) {
    %c0_i32 = arith.constant 0 : i32
    %c0_i32_0 = arith.constant 0 : i32
    return %arg0, %c0_i32 : i32, i32
  }
}

module attributes {stable_mosaic.version = 11 : i64} {
  func.func @_matmul_bn_relu_kernel(%arg0: i32, %arg1: memref<16x160xbf16, #tpu.memory_space<vmem>>, %arg2: memref<160x128xbf16, #tpu.memory_space<vmem>>, %arg3: memref<1x128xf32, #tpu.memory_space<vmem>>, %arg4: memref<1x128xf32, #tpu.memory_space<vmem>>, %arg5: memref<16x128xf32, #tpu.memory_space<vmem>>) attributes {dimension_semantics = [#tpu.dimension_semantics<parallel>], iteration_bounds = array<i64: 2>, scalar_prefetch = 0 : i64, scratch_operands = 0 : i64, tpu.core_type = #tpu.core_type<tc>, window_params = [{transform_indices = @transform_0, window_bounds = array<i64: 16, 160>}, {pipeline_mode = #tpu.pipeline_mode<synchronous>, transform_indices = @transform_1, window_bounds = array<i64: 160, 128>}, {pipeline_mode = #tpu.pipeline_mode<synchronous>, transform_indices = @transform_2, window_bounds = array<i64: 1, 128>}, {pipeline_mode = #tpu.pipeline_mode<synchronous>, transform_indices = @transform_3, window_bounds = array<i64: 1, 128>}, {transform_indices = @transform_4, window_bounds = array<i64: 16, 128>}]} {
    %c0 = arith.constant 0 : index
    %c0_0 = arith.constant 0 : index
    %0 = vector.load %arg1[%c0, %c0_0] : memref<16x160xbf16, #tpu.memory_space<vmem>>, vector<16x160xbf16>
    %c0_1 = arith.constant 0 : index
    %c0_2 = arith.constant 0 : index
    %1 = vector.load %arg2[%c0_1, %c0_2] : memref<160x128xbf16, #tpu.memory_space<vmem>>, vector<160x128xbf16>
    %cst = arith.constant dense<0.000000e+00> : vector<16x128xf32>
    %2 = tpu.matmul %0, %1, %cst {dimension_numbers = #tpu.dot_dimension_numbers<[1], [0], [0], [1], [0, 0, 1, 1], [], []>} : vector<16x160xbf16>, vector<160x128xbf16>, vector<16x128xf32> -> vector<16x128xf32>
    %c0_3 = arith.constant 0 : index
    %c0_4 = arith.constant 0 : index
    %3 = vector.load %arg3[%c0_3, %c0_4] : memref<1x128xf32, #tpu.memory_space<vmem>>, vector<1x128xf32>
    %4 = vector.broadcast %3 : vector<1x128xf32> to vector<16x128xf32>
    %5 = arith.mulf %2, %4 : vector<16x128xf32>
    %c0_5 = arith.constant 0 : index
    %c0_6 = arith.constant 0 : index
    %6 = vector.load %arg4[%c0_5, %c0_6] : memref<1x128xf32, #tpu.memory_space<vmem>>, vector<1x128xf32>
    %7 = vector.broadcast %6 : vector<1x128xf32> to vector<16x128xf32>
    %8 = arith.addf %5, %7 : vector<16x128xf32>
    %cst_7 = arith.constant 0.000000e+00 : f32
    %9 = vector.broadcast %cst_7 : f32 to vector<16x128xf32>
    %10 = arith.maximumf %8, %9 : vector<16x128xf32>
    %c0_8 = arith.constant 0 : index
    %c0_9 = arith.constant 0 : index
    %11 = vector.load %arg5[%c0_8, %c0_9] : memref<16x128xf32, #tpu.memory_space<vmem>>, vector<16x128xf32>
    tpu.vector_store %arg5[%c0_8, %c0_9], %10 {strides = array<i32>} : memref<16x128xf32, #tpu.memory_space<vmem>>, vector<16x128xf32>,
    return
  }
  func.func @transform_0(%arg0: i32) -> (i32, i32) {
    %c0_i32 = arith.constant 0 : i32
    %c0_i32_0 = arith.constant 0 : i32
    return %arg0, %c0_i32 : i32, i32
  }
  func.func @transform_1(%arg0: i32) -> (i32, i32) {
    %c0_i32 = arith.constant 0 : i32
    %c0_i32_0 = arith.constant 0 : i32
    %c0_i32_1 = arith.constant 0 : i32
    return %c0_i32, %c0_i32_0 : i32, i32
  }
  func.func @transform_2(%arg0: i32) -> (i32, i32) {
    %c0_i32 = arith.constant 0 : i32
    %c0_i32_0 = arith.constant 0 : i32
    %c0_i32_1 = arith.constant 0 : i32
    return %c0_i32, %c0_i32_0 : i32, i32
  }
  func.func @transform_3(%arg0: i32) -> (i32, i32) {
    %c0_i32 = arith.constant 0 : i32
    %c0_i32_0 = arith.constant 0 : i32
    %c0_i32_1 = arith.constant 0 : i32
    return %c0_i32, %c0_i32_0 : i32, i32
  }
  func.func @transform_4(%arg0: i32) -> (i32, i32) {
    %c0_i32 = arith.constant 0 : i32
    %c0_i32_0 = arith.constant 0 : i32
    return %arg0, %c0_i32 : i32, i32
  }
}

module attributes {stable_mosaic.version = 11 : i64} {
  func.func @_spatial_softmax_kernel(%arg0: i32, %arg1: memref<1x16x128xf32, #tpu.memory_space<vmem>>, %arg2: memref<1x16x1xf32, #tpu.memory_space<vmem>>, %arg3: memref<1x16x1xf32, #tpu.memory_space<vmem>>, %arg4: memref<1x2x128xf32, #tpu.memory_space<vmem>>) attributes {dimension_semantics = [#tpu.dimension_semantics<parallel>], iteration_bounds = array<i64: 2>, scalar_prefetch = 0 : i64, scratch_operands = 0 : i64, tpu.core_type = #tpu.core_type<tc>, window_params = [{transform_indices = @transform_0, window_bounds = array<i64: 1, 16, 128>}, {pipeline_mode = #tpu.pipeline_mode<synchronous>, transform_indices = @transform_1, window_bounds = array<i64: 1, 16, 1>}, {pipeline_mode = #tpu.pipeline_mode<synchronous>, transform_indices = @transform_2, window_bounds = array<i64: 1, 16, 1>}, {transform_indices = @transform_3, window_bounds = array<i64: 1, 2, 128>}]} {
    %c0 = arith.constant 0 : index
    %c0_0 = arith.constant 0 : index
    %c0_1 = arith.constant 0 : index
    %0 = vector.load %arg1[%c0, %c0_0, %c0_1] : memref<1x16x128xf32, #tpu.memory_space<vmem>>, vector<1x16x128xf32>
    %cst = arith.constant dense<0xFF800000> : vector<1x128xf32>
    %1 = vector.multi_reduction <maximumf>, %0, %cst [1] : vector<1x16x128xf32> to vector<1x128xf32>
    %2 = vector.shape_cast %1 : vector<1x128xf32> to vector<1x1x128xf32>
    %3 = vector.broadcast %2 : vector<1x1x128xf32> to vector<1x16x128xf32>
    %4 = arith.subf %0, %3 : vector<1x16x128xf32>
    %5 = math.exp %4 : vector<1x16x128xf32>
    %cst_2 = arith.constant dense<0.000000e+00> : vector<1x128xf32>
    %6 = vector.multi_reduction <add>, %5, %cst_2 [1] : vector<1x16x128xf32> to vector<1x128xf32>
    %7 = vector.shape_cast %6 : vector<1x128xf32> to vector<1x1x128xf32>
    %c0_3 = arith.constant 0 : index
    %c0_4 = arith.constant 0 : index
    %c0_5 = arith.constant 0 : index
    %8 = vector.load %arg2[%c0_3, %c0_4, %c0_5] : memref<1x16x1xf32, #tpu.memory_space<vmem>>, vector<1x16x1xf32>
    %9 = vector.broadcast %8 : vector<1x16x1xf32> to vector<1x16x128xf32>
    %10 = arith.mulf %5, %9 : vector<1x16x128xf32>
    %cst_6 = arith.constant dense<0.000000e+00> : vector<1x128xf32>
    %11 = vector.multi_reduction <add>, %10, %cst_6 [1] : vector<1x16x128xf32> to vector<1x128xf32>
    %12 = vector.shape_cast %11 : vector<1x128xf32> to vector<1x1x128xf32>
    %c0_7 = arith.constant 0 : index
    %c0_8 = arith.constant 0 : index
    %c0_9 = arith.constant 0 : index
    %13 = vector.load %arg3[%c0_7, %c0_8, %c0_9] : memref<1x16x1xf32, #tpu.memory_space<vmem>>, vector<1x16x1xf32>
    %14 = vector.broadcast %13 : vector<1x16x1xf32> to vector<1x16x128xf32>
    %15 = arith.mulf %5, %14 : vector<1x16x128xf32>
    %cst_10 = arith.constant dense<0.000000e+00> : vector<1x128xf32>
    %16 = vector.multi_reduction <add>, %15, %cst_10 [1] : vector<1x16x128xf32> to vector<1x128xf32>
    %17 = vector.shape_cast %16 : vector<1x128xf32> to vector<1x1x128xf32>
    %18 = tpu.reciprocal %7 {approx = true} : vector<1x1x128xf32> -> vector<1x1x128xf32>
    %19 = arith.mulf %12, %18 : vector<1x1x128xf32>
    %c0_11 = arith.constant 0 : index
    %c0_12 = arith.constant 0 : index
    %c0_13 = arith.constant 0 : index
    %20 = vector.load %arg4[%c0_11, %c0_12, %c0_13] : memref<1x2x128xf32, #tpu.memory_space<vmem>>, vector<1x1x128xf32>
    tpu.vector_store %arg4[%c0_11, %c0_12, %c0_13], %19 {strides = array<i32>} : memref<1x2x128xf32, #tpu.memory_space<vmem>>, vector<1x1x128xf32>,
    %21 = arith.mulf %17, %18 : vector<1x1x128xf32>
    %c0_14 = arith.constant 0 : index
    %c1 = arith.constant 1 : index
    %c0_15 = arith.constant 0 : index
    %22 = vector.load %arg4[%c0_14, %c1, %c0_15] : memref<1x2x128xf32, #tpu.memory_space<vmem>>, vector<1x1x128xf32>
    tpu.vector_store %arg4[%c0_14, %c1, %c0_15], %21 {strides = array<i32>} : memref<1x2x128xf32, #tpu.memory_space<vmem>>, vector<1x1x128xf32>,
    return
  }
  func.func @transform_0(%arg0: i32) -> (i32, i32, i32) {
    %c0_i32 = arith.constant 0 : i32
    %c0_i32_0 = arith.constant 0 : i32
    %c0_i32_1 = arith.constant 0 : i32
    return %arg0, %c0_i32, %c0_i32_0 : i32, i32, i32
  }
  func.func @transform_1(%arg0: i32) -> (i32, i32, i32) {
    %c0_i32 = arith.constant 0 : i32
    %c0_i32_0 = arith.constant 0 : i32
    %c0_i32_1 = arith.constant 0 : i32
    %c0_i32_2 = arith.constant 0 : i32
    return %c0_i32, %c0_i32_0, %c0_i32_1 : i32, i32, i32
  }
  func.func @transform_2(%arg0: i32) -> (i32, i32, i32) {
    %c0_i32 = arith.constant 0 : i32
    %c0_i32_0 = arith.constant 0 : i32
    %c0_i32_1 = arith.constant 0 : i32
    %c0_i32_2 = arith.constant 0 : i32
    return %c0_i32, %c0_i32_0, %c0_i32_1 : i32, i32, i32
  }
  func.func @transform_3(%arg0: i32) -> (i32, i32, i32) {
    %c0_i32 = arith.constant 0 : i32
    %c0_i32_0 = arith.constant 0 : i32
    %c0_i32_1 = arith.constant 0 : i32
    return %arg0, %c0_i32, %c0_i32_0 : i32, i32, i32
  }
}

</mosaic_0001>

<llo_original>
// kernel: _lambda_.5
$region0: #{_lambda_.5}
  #allocation0 [shape = 'u32[]', space=smem, size = 0x4, offset = 0x4, fixed_abs, tag = 'smem constant byte address 0x4 - core index']
  #allocation1 [shape = 'u32[72,128]{1,0:T(1,128)}', space=vmem, size = 0x9000, scoped, tag = 'internal scratch']
  %s0 = inlined_call_operand.vmem [shape: f32[2,16,128], index: 0, kind: input, shape index: {}]
  %s1 = inlined_call_operand.vmem [shape: f32[1,16,1], index: 1, kind: input, shape index: {}]
  %s2 = inlined_call_operand.vmem [shape: f32[1,16,1], index: 2, kind: input, shape index: {}]
  %s3 = inlined_call_operand.vmem [shape: f32[2,2,128], index: 3, kind: output, shape index: {}]
  %s4 = sld [smem:[#allocation0]]
  $region45: #{_lambda_.5} parent=0
    _
  %s6 = ssub.s32 1, %s4
  %s7 = scalar_select 0, %s6, %s4
  loop: start=0, step=1, limit=4
  $region2: #{_lambda_.5} parent=0 // loop_pre_header
    _
  $region3: #{_lambda_.5} parent=0 // loop_header
    %s9 = sphi 0, %s13
    %p10 = scmp.ge.s32.totalorder %s9, 4
    %s19 = sphi 0, %s21
    %s22 = sphi 0, %s19
    %s23 = sphi 0, %s22
    %s39 = sphi 0, %s23
    %s43 = sphi 0, %s43
    %s45 = sphi 0, %s43
    %s46 = sphi 0, %s45
    %s60 = sphi 0, %s46
    %s64 = sphi 0, %s64
    %s66 = sphi 0, %s64
    %s67 = sphi 0, %s66
    %s81 = sphi 0, %s67
    %s87 = sphi 0, %s89
    %s90 = sphi 0, %s87
    %s91 = sphi 0, %s90
    %s107 = sphi 0, %s91
  $region4: #{_lambda_.5} parent=0 // loop_header_branch
    %12 = sbr.rel (%p10) target = $region8
  $region5: #{_lambda_.5} parent=0 // loop_body
    %s14 = ssub.s32 %s9, 1
    %s15 = ssub.s32 %s9, 2
    %s16 = sadd.s32 %s9, 1
    %s17 = ssub.s32 %s9, %s16
    %p18 = scmp.eq.s32.totalorder %s17, 0
    %s20 = sadd.s32 %s19, 1
    %s21 = scalar_select %p18, %s19, %s20
    %p24 = pneg %p18
    %p25 = scmp.eq.s32.totalorder %s9, 1
    %p26 = por %p24, %p25
    %p27 = scmp.ne.s32.totalorder %s19, %s22
    %p28 = scmp.eq.s32.totalorder %s9, 0
    %p29 = por %p27, %p28
    %p30 = scmp.ne.s32.totalorder %s19, %s22
    %p31 = scmp.eq.s32.totalorder %s14, 1
    %p32 = por %p30, %p31
    %p33 = scmp.ne.s32.totalorder %s22, %s23
    %p34 = scmp.eq.s32.totalorder %s14, 0
    %p35 = por %p33, %p34
    %p36 = scmp.ne.s32.totalorder %s22, %s23
    %p37 = scmp.eq.s32.totalorder %s15, 1
    %p38 = por %p36, %p37
    %p40 = scmp.ne.s32.totalorder %s23, %s39
    %p41 = scmp.eq.s32.totalorder %s15, 0
    %p42 = por %p40, %p41
    %s44 = sadd.s32 %s43, 1
    %p47 = scmp.eq.s32.totalorder %s9, 1
    %p48 = scmp.ne.s32.totalorder %s43, %s45
    %p49 = scmp.eq.s32.totalorder %s9, 0
    %p50 = por %p48, %p49
    %p51 = scmp.ne.s32.totalorder %s43, %s45
    %p52 = scmp.eq.s32.totalorder %s14, 1
    %p53 = por %p51, %p52
    %p54 = scmp.ne.s32.totalorder %s45, %s46
    %p55 = scmp.eq.s32.totalorder %s14, 0
    %p56 = por %p54, %p55
    %p57 = scmp.ne.s32.totalorder %s45, %s46
    %p58 = scmp.eq.s32.totalorder %s15, 1
    %p59 = por %p57, %p58
    %p61 = scmp.ne.s32.totalorder %s46, %s60
    %p62 = scmp.eq.s32.totalorder %s15, 0
    %p63 = por %p61, %p62
    %s65 = sadd.s32 %s64, 1
    %p68 = scmp.eq.s32.totalorder %s9, 1
    %p69 = scmp.ne.s32.totalorder %s64, %s66
    %p70 = scmp.eq.s32.totalorder %s9, 0
    %p71 = por %p69, %p70
    %p72 = scmp.ne.s32.totalorder %s64, %s66
    %p73 = scmp.eq.s32.totalorder %s14, 1
    %p74 = por %p72, %p73
    %p75 = scmp.ne.s32.totalorder %s66, %s67
    %p76 = scmp.eq.s32.totalorder %s14, 0
    %p77 = por %p75, %p76
    %p78 = scmp.ne.s32.totalorder %s66, %s67
    %p79 = scmp.eq.s32.totalorder %s15, 1
    %p80 = por %p78, %p79
    %p82 = scmp.ne.s32.totalorder %s67, %s81
    %p83 = scmp.eq.s32.totalorder %s15, 0
    %p84 = por %p82, %p83
    %s85 = ssub.s32 %s9, %s16
    %p86 = scmp.eq.s32.totalorder %s85, 0
    %s88 = sadd.s32 %s87, 1
    %s89 = scalar_select %p86, %s87, %s88
    %p92 = pneg %p86
    %p93 = scmp.eq.s32.totalorder %s9, 1
    %p94 = por %p92, %p93
    %p95 = scmp.ne.s32.totalorder %s87, %s90
    %p96 = scmp.eq.s32.totalorder %s9, 0
    %p97 = por %p95, %p96
    %p98 = scmp.ne.s32.totalorder %s87, %s90
    %p99 = scmp.eq.s32.totalorder %s14, 1
    %p100 = por %p98, %p99
    %p101 = scmp.ne.s32.totalorder %s90, %s91
    %p102 = scmp.eq.s32.totalorder %s14, 0
    %p103 = por %p101, %p102
    %p104 = scmp.ne.s32.totalorder %s90, %s91
    %p105 = scmp.eq.s32.totalorder %s15, 1
    %p106 = por %p104, %p105
    %p108 = scmp.ne.s32.totalorder %s91, %s107
    %p109 = scmp.eq.s32.totalorder %s15, 0
    %p110 = por %p108, %p109
    %p111 = scmp.le.s32.totalorder 1, %s9
    %p112 = scmp.lt.s32.totalorder %s9, 3
    %p113 = pnand %p111, %p112
    %p114 = pneg %p113
    // Predicated region
    $region9: #{_lambda_.5} parent=5 // pred_check
      _
    $region10: #{_lambda_.5} parent=5 // pred_check_branch
      %116 = sbr.rel (%p113) target = $region12
    $region11: #{_lambda_.5} parent=5 // pred_region
      %s117 = ssub.s32 %s9, 1
      // Predicated region
      $region13: #{_lambda_.5} parent=11 // pred_check
        %p118 = pneg %p56
      $region14: #{_lambda_.5} parent=11 // pred_check_branch
        %120 = sbr.rel (%p118) target = $region16
      $region15: #{_lambda_.5} parent=11 // pred_region
        _
      $region16: #{_lambda_.5} parent=11 // pred_fallthru
        _
      // Predicated region
      $region17: #{_lambda_.5} parent=11 // pred_check
        %p121 = pneg %p77
      $region18: #{_lambda_.5} parent=11 // pred_check_branch
        %123 = sbr.rel (%p121) target = $region20
      $region19: #{_lambda_.5} parent=11 // pred_region
        _
      $region20: #{_lambda_.5} parent=11 // pred_fallthru
        _
    $region12: #{_lambda_.5} parent=5 // pred_fallthru
      _
    %p124 = scmp.lt.s32.totalorder %s9, 2
    // Predicated region
    $region21: #{_lambda_.5} parent=5 // pred_check
      %p125 = pneg %p124
    $region22: #{_lambda_.5} parent=5 // pred_check_branch
      %127 = sbr.rel (%p125) target = $region24
    $region23: #{_lambda_.5} parent=5 // pred_region
      // Predicated region
      $region25: #{_lambda_.5} parent=23 // pred_check
        %p128 = pneg %p29
      $region26: #{_lambda_.5} parent=23 // pred_check_branch
        %130 = sbr.rel (%p128) target = $region28
      $region27: #{_lambda_.5} parent=23 // pred_region
        %p131 = scmp.lt.s32.totalorder %s9, 1
        %s132 = scalar_select %p131, %s9, 1
        %s133 = smul.addr %s132, 2
        %s134 = smul.addr %s133, 8
        %s135 = scalar_lea.vmem %s0, %s134
      $region28: #{_lambda_.5} parent=23 // pred_fallthru
        _
    $region24: #{_lambda_.5} parent=5 // pred_fallthru
      _
    %p136 = scmp.le.s32.totalorder 1, %s9
    %p137 = scmp.lt.s32.totalorder %s9, 3
    %p138 = pnand %p136, %p137
    %p139 = pneg %p138
    // Predicated region
    $region29: #{_lambda_.5} parent=5 // pred_check
      _
    $region30: #{_lambda_.5} parent=5 // pred_check_branch
      %141 = sbr.rel (%p138) target = $region32
    $region31: #{_lambda_.5} parent=5 // pred_region
      %s142 = ssub.s32 %s9, 1
      %p143 = scmp.lt.s32.totalorder %s14, 1
      %s144 = scalar_select %p143, %s14, 1
      %s145 = smul.addr %s144, 2
      %s146 = smul.addr %s145, 8
      %s147 = scalar_lea.vmem %s0, %s146
      %p148 = pneg %p35
      %p149 = pneg %p32
      %p150 = pneg %p56
      %p151 = pneg %p53
      %p152 = pneg %p77
      %p153 = pneg %p74
      %p154 = pneg %p103
      %p155 = pneg %p100
      %p156 = scmp.lt.s32.totalorder %s14, 1
      %s157 = scalar_select %p156, %s14, 1
      %s158 = smul.addr %s157, 2
      %s159 = scalar_lea.vmem %s3, %s158
      %p160 = scmp.lt.s32.totalorder %s14, 1
      %s161 = scalar_select %p160, %s14, 1
      %s162 = smul.addr %s161, 2
      %s163 = smul.addr %s162, 8
      %s164 = scalar_lea.vmem %s0, %s163
      %p165 = scmp.lt.s32.totalorder %s14, 1
      %s166 = scalar_select %p165, %s14, 1
      %s167 = smul.addr %s166, 2
      %s168 = scalar_lea.vmem %s3, %s167
      %v169 = vld [vmem:[%s164] sm:$0xff]
      %v170 = vld [vmem:[%s164 + $0x8] sm:$0xff]
      %v171 = vmax.f32 %v169, %v170
      %v172 = vrot.slane %v171, 4
      %v173 = vmax.f32 %v171, %v172
      %v174 = vrot.slane %v173, 2
      %v175 = vmax.f32 %v173, %v174
      %v176 = vrot.slane %v175, 1
      %v177 = vmax.f32 %v175, %v176
      %v178 = vsub.f32 %v169, %v177
      %v179 = vsub.f32 %v170, %v177
      %v180 = vmul.f32 %v178, 1.442695
      %v181 = vpow.pop %v180
      %v182 = vmul.f32 %v179, 1.442695
      %v183 = vpow.pop %v182
      %v184 = vadd.f32 %v181, %v183
      %v185 = vrot.slane %v184, 4
      %v186 = vadd.f32 %v184, %v185
      %v187 = vrot.slane %v186, 2
      %v188 = vadd.f32 %v186, %v187
      %v189 = vrot.slane %v188, 1
      %v190 = vadd.f32 %v188, %v189
      %v191 = vld [vmem:[%s1] sm:$0xff]
      %v192 = vld [vmem:[%s1 + $0x8] sm:$0xff]
      %194 = vset.pattern.permute.xlu0 0
      %195 = vperm.xlu0 %194, %v191
      %v196 = vpop.permute.xlu0 %195
      %199 = vset.pattern.permute.xlu0 0
      %200 = vperm.xlu0 %199, %v192
      %v201 = vpop.permute.xlu0 %200
      %v203 = vmul.f32 %v181, %v196
      %v204 = vmul.f32 %v183, %v201
      %v205 = vadd.f32 %v203, %v204
      %v206 = vrot.slane %v205, 4
      %v207 = vadd.f32 %v205, %v206
      %v208 = vrot.slane %v207, 2
      %v209 = vadd.f32 %v207, %v208
      %v210 = vrot.slane %v209, 1
      %v211 = vadd.f32 %v209, %v210
      %v212 = vld [vmem:[%s2] sm:$0xff]
      %v213 = vld [vmem:[%s2 + $0x8] sm:$0xff]
      %215 = vset.pattern.permute.xlu0 0
      %216 = vperm.xlu0 %215, %v212
      %v217 = vpop.permute.xlu0 %216
      %220 = vset.pattern.permute.xlu0 0
      %221 = vperm.xlu0 %220, %v213
      %v222 = vpop.permute.xlu0 %221
      %v224 = vmul.f32 %v181, %v217
      %v225 = vmul.f32 %v183, %v222
      %v226 = vadd.f32 %v224, %v225
      %v227 = vrot.slane %v226, 4
      %v228 = vadd.f32 %v226, %v227
      %v229 = vrot.slane %v228, 2
      %v230 = vadd.f32 %v228, %v229
      %v231 = vrot.slane %v230, 1
      %v232 = vadd.f32 %v230, %v231
      %v233 = vrcp.pop %v190
      %v234 = vmul.f32 %v211, %v233
      %235 = vst [vmem:[%s168] sm:$0x1] %v234
      %v236 = vmul.f32 %v232, %v233
      %237 = vst [vmem:[%s168 + $0x1] sm:$0x1] %v236
      %p238 = scmp.lt.s32.totalorder %s14, 1
      %s239 = scalar_select %p238, %s14, 1
      %s240 = smul.addr %s239, 2
      %s241 = scalar_lea.vmem %s3, %s240
      // Predicated region
      $region33: #{_lambda_.5} parent=31 // pred_check
        %p242 = pneg %p100
      $region34: #{_lambda_.5} parent=31 // pred_check_branch
        %244 = sbr.rel (%p242) target = $region36
      $region35: #{_lambda_.5} parent=31 // pred_region
        _
      $region36: #{_lambda_.5} parent=31 // pred_fallthru
        _
    $region32: #{_lambda_.5} parent=5 // pred_fallthru
      _
    %p245 = scmp.le.s32.totalorder 2, %s9
    // Predicated region
    $region37: #{_lambda_.5} parent=5 // pred_check
      %p246 = pneg %p245
    $region38: #{_lambda_.5} parent=5 // pred_check_branch
      %248 = sbr.rel (%p246) target = $region40
    $region39: #{_lambda_.5} parent=5 // pred_region
      %s249 = ssub.s32 %s9, 2
      // Predicated region
      $region41: #{_lambda_.5} parent=39 // pred_check
        %p250 = pneg %p106
      $region42: #{_lambda_.5} parent=39 // pred_check_branch
        %252 = sbr.rel (%p250) target = $region44
      $region43: #{_lambda_.5} parent=39 // pred_region
        %p253 = scmp.lt.s32.totalorder %s15, 1
        %s254 = scalar_select %p253, %s15, 1
        %s255 = smul.addr %s254, 2
        %s256 = scalar_lea.vmem %s3, %s255
      $region44: #{_lambda_.5} parent=39 // pred_fallthru
        _
    $region40: #{_lambda_.5} parent=5 // pred_fallthru
      _
  $region6: #{_lambda_.5} parent=0 // loop_footer
    %s13 = sadd.s32 1, %s9
  $region7: #{_lambda_.5} parent=0 // loop_footer_branch
    %8 = sbr.rel target = $region3
  $region8: #{_lambda_.5} parent=0 // loop_exit
    _

// kernel: _lambda_.7
$region0: #{_lambda_.7}
  #allocation0 [shape = 'u32[]', space=smem, size = 0x4, offset = 0x4, fixed_abs, tag = 'smem constant byte address 0x4 - core index']
  #allocation1 [shape = 'u32[72,128]{1,0:T(1,128)}', space=vmem, size = 0x9000, scoped, tag = 'internal scratch']
  #allocation2 [shape = 'u32[2048]{0}', space=vmem, size = 0x2000, scoped, tag = 'scoped memory for _lambda_.7']
  #allocation3 [shape = 'u32[2048]{0}', space=vmem, size = 0x2000, scoped, tag = 'scoped memory for _lambda_.7']
  #allocation4 [shape = 'u32[2048]{0}', space=vmem, size = 0x2000, scoped, tag = 'scoped memory for _lambda_.7']
  #allocation5 [shape = 'u32[2048]{0}', space=vmem, size = 0x2000, scoped, tag = 'scoped memory for _lambda_.7']
  #allocation6 [shape = 'u32[2048]{0}', space=vmem, size = 0x2000, scoped, tag = 'scoped memory for _lambda_.7']
  %s0 = inlined_call_operand.vmem [shape: bf16[160,128], index: 0, kind: input, shape index: {}]
  %s1 = inlined_call_operand.vmem [shape: f32[1,128], index: 1, kind: input, shape index: {}]
  %s2 = inlined_call_operand.vmem [shape: f32[1,128], index: 2, kind: input, shape index: {}]
  %s3 = inlined_call_operand.vmem [shape: bf16[32,144], index: 3, kind: input, shape index: {}]
  %s4 = inlined_call_operand.<no memory space> [shape: bf16[], index: 4, kind: input, shape index: {}]
  %s5 = inlined_call_operand.vmem [shape: f32[32,128], index: 5, kind: output, shape index: {}]
  %s6 = sld [smem:[#allocation0]]
  $region49: #{_lambda_.7} parent=0
    _
  %s8 = ssub.s32 1, %s6
  %s9 = scalar_select 0, %s8, %s6
  %v10 = vstv %s4
  %v11 = vunpack.i.l.bf16 %v10
  %v13 = vunpack.i.h.bf16 %v10
  loop: start=0, step=1, limit=4
  $region2: #{_lambda_.7} parent=0 // loop_pre_header
    _
  $region3: #{_lambda_.7} parent=0 // loop_header
    %s16 = sphi 0, %s20
    %p17 = scmp.ge.s32.totalorder %s16, 4
    %s26 = sphi 0, %s28
    %s29 = sphi 0, %s26
    %s30 = sphi 0, %s29
    %s46 = sphi 0, %s30
    %s50 = sphi 0, %s50
    %s52 = sphi 0, %s50
    %s53 = sphi 0, %s52
    %s67 = sphi 0, %s53
    %s71 = sphi 0, %s71
    %s73 = sphi 0, %s71
    %s74 = sphi 0, %s73
    %s88 = sphi 0, %s74
    %s92 = sphi 0, %s92
    %s94 = sphi 0, %s92
    %s95 = sphi 0, %s94
    %s109 = sphi 0, %s95
    %s115 = sphi 0, %s117
    %s118 = sphi 0, %s115
    %s119 = sphi 0, %s118
    %s135 = sphi 0, %s119
  $region4: #{_lambda_.7} parent=0 // loop_header_branch
    %19 = sbr.rel (%p17) target = $region8
  $region5: #{_lambda_.7} parent=0 // loop_body
    %s21 = ssub.s32 %s16, 1
    %s22 = ssub.s32 %s16, 2
    %s23 = sadd.s32 %s16, 1
    %s24 = ssub.s32 %s16, %s23
    %p25 = scmp.eq.s32.totalorder %s24, 0
    %s27 = sadd.s32 %s26, 1
    %s28 = scalar_select %p25, %s26, %s27
    %p31 = pneg %p25
    %p32 = scmp.eq.s32.totalorder %s16, 1
    %p33 = por %p31, %p32
    %p34 = scmp.ne.s32.totalorder %s26, %s29
    %p35 = scmp.eq.s32.totalorder %s16, 0
    %p36 = por %p34, %p35
    %p37 = scmp.ne.s32.totalorder %s26, %s29
    %p38 = scmp.eq.s32.totalorder %s21, 1
    %p39 = por %p37, %p38
    %p40 = scmp.ne.s32.totalorder %s29, %s30
    %p41 = scmp.eq.s32.totalorder %s21, 0
    %p42 = por %p40, %p41
    %p43 = scmp.ne.s32.totalorder %s29, %s30
    %p44 = scmp.eq.s32.totalorder %s22, 1
    %p45 = por %p43, %p44
    %p47 = scmp.ne.s32.totalorder %s30, %s46
    %p48 = scmp.eq.s32.totalorder %s22, 0
    %p49 = por %p47, %p48
    %s51 = sadd.s32 %s50, 1
    %p54 = scmp.eq.s32.totalorder %s16, 1
    %p55 = scmp.ne.s32.totalorder %s50, %s52
    %p56 = scmp.eq.s32.totalorder %s16, 0
    %p57 = por %p55, %p56
    %p58 = scmp.ne.s32.totalorder %s50, %s52
    %p59 = scmp.eq.s32.totalorder %s21, 1
    %p60 = por %p58, %p59
    %p61 = scmp.ne.s32.totalorder %s52, %s53
    %p62 = scmp.eq.s32.totalorder %s21, 0
    %p63 = por %p61, %p62
    %p64 = scmp.ne.s32.totalorder %s52, %s53
    %p65 = scmp.eq.s32.totalorder %s22, 1
    %p66 = por %p64, %p65
    %p68 = scmp.ne.s32.totalorder %s53, %s67
    %p69 = scmp.eq.s32.totalorder %s22, 0
    %p70 = por %p68, %p69
    %s72 = sadd.s32 %s71, 1
    %p75 = scmp.eq.s32.totalorder %s16, 1
    %p76 = scmp.ne.s32.totalorder %s71, %s73
    %p77 = scmp.eq.s32.totalorder %s16, 0
    %p78 = por %p76, %p77
    %p79 = scmp.ne.s32.totalorder %s71, %s73
    %p80 = scmp.eq.s32.totalorder %s21, 1
    %p81 = por %p79, %p80
    %p82 = scmp.ne.s32.totalorder %s73, %s74
    %p83 = scmp.eq.s32.totalorder %s21, 0
    %p84 = por %p82, %p83
    %p85 = scmp.ne.s32.totalorder %s73, %s74
    %p86 = scmp.eq.s32.totalorder %s22, 1
    %p87 = por %p85, %p86
    %p89 = scmp.ne.s32.totalorder %s74, %s88
    %p90 = scmp.eq.s32.totalorder %s22, 0
    %p91 = por %p89, %p90
    %s93 = sadd.s32 %s92, 1
    %p96 = scmp.eq.s32.totalorder %s16, 1
    %p97 = scmp.ne.s32.totalorder %s92, %s94
    %p98 = scmp.eq.s32.totalorder %s16, 0
    %p99 = por %p97, %p98
    %p100 = scmp.ne.s32.totalorder %s92, %s94
    %p101 = scmp.eq.s32.totalorder %s21, 1
    %p102 = por %p100, %p101
    %p103 = scmp.ne.s32.totalorder %s94, %s95
    %p104 = scmp.eq.s32.totalorder %s21, 0
    %p105 = por %p103, %p104
    %p106 = scmp.ne.s32.totalorder %s94, %s95
    %p107 = scmp.eq.s32.totalorder %s22, 1
    %p108 = por %p106, %p107
    %p110 = scmp.ne.s32.totalorder %s95, %s109
    %p111 = scmp.eq.s32.totalorder %s22, 0
    %p112 = por %p110, %p111
    %s113 = ssub.s32 %s16, %s23
    %p114 = scmp.eq.s32.totalorder %s113, 0
    %s116 = sadd.s32 %s115, 1
    %s117 = scalar_select %p114, %s115, %s116
    %p120 = pneg %p114
    %p121 = scmp.eq.s32.totalorder %s16, 1
    %p122 = por %p120, %p121
    %p123 = scmp.ne.s32.totalorder %s115, %s118
    %p124 = scmp.eq.s32.totalorder %s16, 0
    %p125 = por %p123, %p124
    %p126 = scmp.ne.s32.totalorder %s115, %s118
    %p127 = scmp.eq.s32.totalorder %s21, 1
    %p128 = por %p126, %p127
    %p129 = scmp.ne.s32.totalorder %s118, %s119
    %p130 = scmp.eq.s32.totalorder %s21, 0
    %p131 = por %p129, %p130
    %p132 = scmp.ne.s32.totalorder %s118, %s119
    %p133 = scmp.eq.s32.totalorder %s22, 1
    %p134 = por %p132, %p133
    %p136 = scmp.ne.s32.totalorder %s119, %s135
    %p137 = scmp.eq.s32.totalorder %s22, 0
    %p138 = por %p136, %p137
    %p139 = scmp.le.s32.totalorder 1, %s16
    %p140 = scmp.lt.s32.totalorder %s16, 3
    %p141 = pnand %p139, %p140
    %p142 = pneg %p141
    // Predicated region
    $region9: #{_lambda_.7} parent=5 // pred_check
      _
    $region10: #{_lambda_.7} parent=5 // pred_check_branch
      %144 = sbr.rel (%p141) target = $region12
    $region11: #{_lambda_.7} parent=5 // pred_region
      %s145 = ssub.s32 %s16, 1
      // Predicated region
      $region13: #{_lambda_.7} parent=11 // pred_check
        %p146 = pneg %p63
      $region14: #{_lambda_.7} parent=11 // pred_check_branch
        %148 = sbr.rel (%p146) target = $region16
      $region15: #{_lambda_.7} parent=11 // pred_region
        _
      $region16: #{_lambda_.7} parent=11 // pred_fallthru
        _
      // Predicated region
      $region17: #{_lambda_.7} parent=11 // pred_check
        %p149 = pneg %p84
      $region18: #{_lambda_.7} parent=11 // pred_check_branch
        %151 = sbr.rel (%p149) target = $region20
      $region19: #{_lambda_.7} parent=11 // pred_region
        _
      $region20: #{_lambda_.7} parent=11 // pred_fallthru
        _
      // Predicated region
      $region21: #{_lambda_.7} parent=11 // pred_check
        %p152 = pneg %p105
      $region22: #{_lambda_.7} parent=11 // pred_check_branch
        %154 = sbr.rel (%p152) target = $region24
      $region23: #{_lambda_.7} parent=11 // pred_region
        _
      $region24: #{_lambda_.7} parent=11 // pred_fallthru
        _
    $region12: #{_lambda_.7} parent=5 // pred_fallthru
      _
    %p155 = scmp.lt.s32.totalorder %s16, 2
    // Predicated region
    $region25: #{_lambda_.7} parent=5 // pred_check
      %p156 = pneg %p155
    $region26: #{_lambda_.7} parent=5 // pred_check_branch
      %158 = sbr.rel (%p156) target = $region28
    $region27: #{_lambda_.7} parent=5 // pred_region
      // Predicated region
      $region29: #{_lambda_.7} parent=27 // pred_check
        %p159 = pneg %p36
      $region30: #{_lambda_.7} parent=27 // pred_check_branch
        %161 = sbr.rel (%p159) target = $region32
      $region31: #{_lambda_.7} parent=27 // pred_region
        %s162 = smul.u32 2, %s16
        %p163 = scmp.lt.s32.totalorder %s162, 3
        %s164 = scalar_select %p163, %s162, 3
        %s165 = smul.addr %s164, 2
        %s166 = smul.addr %s165, 4
        %s167 = scalar_lea.vmem %s3, %s166
        %s168 = smul.u32 2, %s16
      $region32: #{_lambda_.7} parent=27 // pred_fallthru
        _
    $region28: #{_lambda_.7} parent=5 // pred_fallthru
      _
    %p169 = scmp.le.s32.totalorder 1, %s16
    %p170 = scmp.lt.s32.totalorder %s16, 3
    %p171 = pnand %p169, %p170
    %p172 = pneg %p171
    // Predicated region
    $region33: #{_lambda_.7} parent=5 // pred_check
      _
    $region34: #{_lambda_.7} parent=5 // pred_check_branch
      %174 = sbr.rel (%p171) target = $region36
    $region35: #{_lambda_.7} parent=5 // pred_region
      #allocation7 [shape = 'u8[8192]{0}', space=vmem, size = 0x2000, dematerialized = true, scoped, tag = 'FusionAdapter Buffer %fusion.3 = bf16[32,160]{1,0:T(8,128)(2,1)} fusion(%param_3.27, %param_4.1), kind=kLoop, calls=%fused_computation.29.clone, metadata={op_name="jit(<lambda>)/jit(_pad)/pad" stack_frame_id=18}']
      %s175 = ssub.s32 %s16, 1
      %s176 = smul.u32 2, %s21
      %p177 = scmp.lt.s32.totalorder %s176, 3
      %s178 = scalar_select %p177, %s176, 3
      %s179 = smul.addr %s178, 2
      %s180 = smul.addr %s179, 4
      %s181 = scalar_lea.vmem %s3, %s180
      %p182 = pneg %p42
      %p183 = pneg %p39
      %p184 = pneg %p63
      %p185 = pneg %p60
      %p186 = pneg %p84
      %p187 = pneg %p81
      %p188 = pneg %p105
      %p189 = pneg %p102
      %p190 = pneg %p131
      %p191 = pneg %p128
      %s192 = smul.u32 2, %s21
      %p193 = scmp.lt.s32.totalorder %s192, 3
      %s194 = scalar_select %p193, %s192, 3
      %s195 = smul.addr %s194, 8
      %s196 = scalar_lea.vmem %s5, %s195
      %s197 = smul.u32 2, %s21
      %p198 = scmp.lt.s32.totalorder %s197, 3
      %s199 = scalar_select %p198, %s197, 3
      %s200 = smul.addr %s199, 2
      %s201 = smul.addr %s200, 4
      %s202 = scalar_lea.vmem %s3, %s201
      %s203 = smul.u32 2, %s21
      %s204 = smul.u32 2, %s21
      %p205 = scmp.lt.s32.totalorder %s204, 3
      %s206 = scalar_select %p205, %s204, 3
      %s207 = smul.addr %s206, 8
      %s208 = scalar_lea.vmem %s5, %s207
      %s209 = smul.u32 2, %s21
      %v210 = vld [vmem:[%s202] sm:$0xf]
      %v211 = vunpack.c.l.bf16 %v210
      %v212 = vunpack.c.h.bf16 %v210
      %v213 = vlaneseq
      %v214 = vand.u32 %v213, 127
      %vm216 = vcmp.lt.s32.totalorder %v214, 144
      %v217 = vsel %vm216, %v211, %v11
      %v218 = vpack.c.bf16 0.0, %v217
      %s220 = ssub.s32 16, 1
      %221 = vst [vmem:[#allocation7] sm:%s220] %v218
      %s222 = scalar_lea.vmem %s202, 4
      %s224 = sor.u32 255, 127
      %s225 = sand.u32 %s224, 85
      %s226 = sshrl.u32 %s225, 1
      %s227 = sor.u32 %s225, %s226
      %s228 = sand.u32 51, %s227
      %s229 = sshrl.u32 %s228, 2
      %s230 = sor.u32 %s228, %s229
      %s231 = sand.u32 15, %s230
      %v232 = vld [vmem:[%s222] sm:%s231]
      %v233 = vunpack.c.l.bf16 %v232
      %v234 = vunpack.c.h.bf16 %v232
      %v235 = vlaneseq
      %v236 = vand.u32 %v235, 127
      %v237 = vadd.s32 %v236, 128
      %vm238 = vcmp.lt.s32.totalorder %v237, 144
      %v239 = vsel %vm238, %v233, %v11
      %s240 = scalar_lea.vmem [#allocation7], 4
      %v241 = vpack.c.bf16 0.0, %v239
      %s243 = ssub.s32 16, 1
      %244 = vst [vmem:[%s240] sm:%s243] %v241
      %s245 = scalar_lea.vmem %s202, 8
      %v246 = vld [vmem:[%s245] sm:$0xf]
      %v247 = vunpack.c.l.bf16 %v246
      %v248 = vunpack.c.h.bf16 %v246
      %v249 = vlaneseq
      %v250 = vand.u32 %v249, 127
      %vm252 = vcmp.lt.s32.totalorder %v250, 144
      %v253 = vsel %vm252, %v247, %v11
      %s254 = scalar_lea.vmem [#allocation7], 8
      %v255 = vpack.c.bf16 0.0, %v253
      %s257 = ssub.s32 16, 1
      %258 = vst [vmem:[%s254] sm:%s257] %v255
      %s259 = scalar_lea.vmem %s202, 12
      %s261 = sor.u32 255, 127
      %s262 = sand.u32 %s261, 85
      %s263 = sshrl.u32 %s262, 1
      %s264 = sor.u32 %s262, %s263
      %s265 = sand.u32 51, %s264
      %s266 = sshrl.u32 %s265, 2
      %s267 = sor.u32 %s265, %s266
      %s268 = sand.u32 15, %s267
      %v269 = vld [vmem:[%s259] sm:%s268]
      %v270 = vunpack.c.l.bf16 %v269
      %v271 = vunpack.c.h.bf16 %v269
      %v272 = vlaneseq
      %v273 = vand.u32 %v272, 127
      %v274 = vadd.s32 %v273, 128
      %vm275 = vcmp.lt.s32.totalorder %v274, 144
      %v276 = vsel %vm275, %v270, %v11
      %s277 = scalar_lea.vmem [#allocation7], 12
      %v278 = vpack.c.bf16 0.0, %v276
      %s280 = ssub.s32 16, 1
      %281 = vst [vmem:[%s277] sm:%s280] %v278
      %v283 = vld [vmem:[#allocation7] sm:$0xff]
      %v284 = vld [vmem:[#allocation7 + $0x8] sm:$0xff]
      %v285 = vld [vmem:[%s0] sm:$0xf]
      %v286 = vld [vmem:[%s0 + $0x4] sm:$0xf]
      %v287 = vld [vmem:[%s0 + $0x8] sm:$0xf]
      %v288 = vld [vmem:[%s0 + $0xc] sm:$0xf]
      %v289 = vld [vmem:[%s0 + $0x10] sm:$0xf]
      %v290 = vld [vmem:[%s0 + $0x14] sm:$0xf]
      %v291 = vld [vmem:[%s0 + $0x18] sm:$0xf]
      %v292 = vld [vmem:[%s0 + $0x1c] sm:$0xf]
      %v293 = vld [vmem:[%s0 + $0x20] sm:$0xf]
      %v294 = vld [vmem:[%s0 + $0x24] sm:$0xf]
      %v295 = vld [vmem:[%s0 + $0x28] sm:$0xf]
      %v296 = vld [vmem:[%s0 + $0x2c] sm:$0xf]
      %v297 = vld [vmem:[%s0 + $0x30] sm:$0xf]
      %v298 = vld [vmem:[%s0 + $0x34] sm:$0xf]
      %v299 = vld [vmem:[%s0 + $0x38] sm:$0xf]
      %v300 = vld [vmem:[%s0 + $0x3c] sm:$0xf]
      %v301 = vld [vmem:[%s0 + $0x40] sm:$0xf]
      %v302 = vld [vmem:[%s0 + $0x44] sm:$0xf]
      %v303 = vld [vmem:[%s0 + $0x48] sm:$0xf]
      %v304 = vld [vmem:[%s0 + $0x4c] sm:$0xf]
      %v307 = vunpack.c.l.b16 %v283
      %v308 = vunpack.c.h.b16 %v283
      %v309 = vunpack.c.l.b16 %v284
      %v310 = vunpack.c.h.b16 %v284
      %v311 = vpack.c.b16 %v309, %v307
      %v312 = vpack.c.b16 %v310, %v308
      %v334 = vunpack.c.l.b16 %v285
      %v335 = vunpack.c.l.b16 %v286
      %v336 = vunpack.c.l.b16 %v287
      %v337 = vunpack.c.l.b16 %v288
      %v338 = vunpack.c.l.b16 %v289
      %v339 = vunpack.c.l.b16 %v290
      %v340 = vunpack.c.l.b16 %v291
      %v341 = vunpack.c.l.b16 %v292
      %v342 = vunpack.c.l.b16 %v293
      %v343 = vunpack.c.l.b16 %v294
      %v344 = vunpack.c.l.b16 %v295
      %v345 = vunpack.c.l.b16 %v296
      %v346 = vunpack.c.l.b16 %v297
      %v347 = vunpack.c.l.b16 %v298
      %v348 = vunpack.c.l.b16 %v299
      %v349 = vunpack.c.l.b16 %v300
      %v350 = vunpack.c.l.b16 %v301
      %v351 = vunpack.c.l.b16 %v302
      %v352 = vunpack.c.l.b16 %v303
      %v353 = vunpack.c.l.b16 %v304
      %v354 = vpack.c.b16 %v335, %v334
      %v355 = vpack.c.b16 %v337, %v336
      %v356 = vpack.c.b16 %v339, %v338
      %v357 = vpack.c.b16 %v341, %v340
      %v358 = vpack.c.b16 %v343, %v342
      %v359 = vpack.c.b16 %v345, %v344
      %v360 = vpack.c.b16 %v347, %v346
      %v361 = vpack.c.b16 %v349, %v348
      %v362 = vpack.c.b16 %v351, %v350
      %v363 = vpack.c.b16 %v353, %v352
      %vm374 = vcmask 261120
      %v376 = vsel %vm374, %v312, 0
      %378 = vmatpush.bf16.msra.mxu0 %v361
      %379 = vmatpush.bf16.msra.mxu0 %v360
      %380 = vmatpush.bf16.msra.mxu0 %v359
      %381 = vmatpush.bf16.msra.mxu0 %v358
      %382 = vmatpush.bf16.msra.mxu0 %v357
      %383 = vmatpush.bf16.msra.mxu0 %v356
      %384 = vmatpush.bf16.msra.mxu0 %v355
      %385 = vmatpush.bf16.msra.mxu0 %v354
      %386 = vmatmul.bf16.gmra.mxu0 %v311
      %v387 = vpop.f32.mrf.mxu0
      %v388 = vadd.f32 0.0, %v387
      %v389 = vpop.f32.mrf.mxu0
      %v390 = vadd.f32 0.0, %v389
      %391 = vdwg.mxu0
      %392 = vmatpush.bf16.msra.mxu0 0
      %393 = vmatpush.bf16.msra.mxu0 0
      %394 = vmatpush.bf16.msra.mxu0 0
      %395 = vmatpush.bf16.msra.mxu0 0
      %396 = vmatpush.bf16.msra.mxu0 0
      %397 = vmatpush.bf16.msra.mxu0 0
      %398 = vmatpush.bf16.msra.mxu0 %v363
      %399 = vmatpush.bf16.msra.mxu0 %v362
      %400 = vmatmul.bf16.gmra.mxu0 %v376
      %v401 = vpop.f32.mrf.mxu0
      %v402 = vadd.f32 %v388, %v401
      %v403 = vpop.f32.mrf.mxu0
      %v404 = vadd.f32 %v390, %v403
      %405 = vdwg.mxu0
      %v406 = vld [vmem:[%s1] sm:$0x1]
      %v408 = vperm.slane %v406, 0
      %v410 = vmul.f32 %v402, %v408
      %v411 = vmul.f32 %v404, %v408
      %v412 = vld [vmem:[%s2] sm:$0x1]
      %v414 = vperm.slane %v412, 0
      %v416 = vadd.f32 %v410, %v414
      %v417 = vadd.f32 %v411, %v414
      %v418 = vmax.f32 %v416, 0.0
      %v419 = vmax.f32 %v417, 0.0
      %420 = vst [vmem:[%s208] sm:$0xff] %v418
      %421 = vst [vmem:[%s208 + $0x8] sm:$0xff] %v419
      %s422 = smul.u32 2, %s21
      %p423 = scmp.lt.s32.totalorder %s422, 3
      %s424 = scalar_select %p423, %s422, 3
      %s425 = smul.addr %s424, 8
      %s426 = scalar_lea.vmem %s5, %s425
      // Predicated region
      $region37: #{_lambda_.7} parent=35 // pred_check
        %p427 = pneg %p128
      $region38: #{_lambda_.7} parent=35 // pred_check_branch
        %429 = sbr.rel (%p427) target = $region40
      $region39: #{_lambda_.7} parent=35 // pred_region
        %s430 = smul.u32 2, %s21
      $region40: #{_lambda_.7} parent=35 // pred_fallthru
        _
    $region36: #{_lambda_.7} parent=5 // pred_fallthru
      _
    %p431 = scmp.le.s32.totalorder 2, %s16
    // Predicated region
    $region41: #{_lambda_.7} parent=5 // pred_check
      %p432 = pneg %p431
    $region42: #{_lambda_.7} parent=5 // pred_check_branch
      %434 = sbr.rel (%p432) target = $region44
    $region43: #{_lambda_.7} parent=5 // pred_region
      %s435 = ssub.s32 %s16, 2
      // Predicated region
      $region45: #{_lambda_.7} parent=43 // pred_check
        %p436 = pneg %p134
      $region46: #{_lambda_.7} parent=43 // pred_check_branch
        %438 = sbr.rel (%p436) target = $region48
      $region47: #{_lambda_.7} parent=43 // pred_region
        %s439 = smul.u32 2, %s22
        %p440 = scmp.lt.s32.totalorder %s439, 3
        %s441 = scalar_select %p440, %s439, 3
        %s442 = smul.addr %s441, 8
        %s443 = scalar_lea.vmem %s5, %s442
      $region48: #{_lambda_.7} parent=43 // pred_fallthru
        _
    $region44: #{_lambda_.7} parent=5 // pred_fallthru
      _
  $region6: #{_lambda_.7} parent=0 // loop_footer
    %s20 = sadd.s32 1, %s16
  $region7: #{_lambda_.7} parent=0 // loop_footer_branch
    %15 = sbr.rel target = $region3
  $region8: #{_lambda_.7} parent=0 // loop_exit
    _

// kernel: _lambda_.6
$region0: #{_lambda_.6}
  #allocation0 [shape = 'u32[]', space=smem, size = 0x4, offset = 0x4, fixed_abs, tag = 'smem constant byte address 0x4 - core index']
  #allocation1 [shape = 'u32[72,128]{1,0:T(1,128)}', space=vmem, size = 0x9000, scoped, tag = 'internal scratch']
  #allocation2 [shape = 'u32[2048]{0}', space=vmem, size = 0x2000, scoped, tag = 'scoped memory for _lambda_.6']
  #allocation3 [shape = 'u32[2048]{0}', space=vmem, size = 0x2000, scoped, tag = 'scoped memory for _lambda_.6']
  #allocation4 [shape = 'u32[2048]{0}', space=vmem, size = 0x2000, scoped, tag = 'scoped memory for _lambda_.6']
  #allocation5 [shape = 'u32[2048]{0}', space=vmem, size = 0x2000, scoped, tag = 'scoped memory for _lambda_.6']
  #allocation6 [shape = 'u32[2048]{0}', space=vmem, size = 0x2000, scoped, tag = 'scoped memory for _lambda_.6']
  %s0 = inlined_call_operand.vmem [shape: bf16[32,128], index: 0, kind: input, shape index: {}]
  %s1 = inlined_call_operand.vmem [shape: f32[1,128], index: 1, kind: input, shape index: {}]
  %s2 = inlined_call_operand.vmem [shape: f32[1,128], index: 2, kind: input, shape index: {}]
  %s3 = inlined_call_operand.vmem [shape: bf16[72,25], index: 3, kind: input, shape index: {}]
  %s4 = inlined_call_operand.<no memory space> [shape: bf16[], index: 4, kind: input, shape index: {}]
  %s5 = inlined_call_operand.vmem [shape: f32[72,128], index: 5, kind: output, shape index: {}]
  %s6 = sld [smem:[#allocation0]]
  $region97: #{_lambda_.6} parent=0
    _
  %s8 = ssub.s32 1, %s6
  %s9 = scalar_select 0, %s8, %s6
  %v10 = vstv %s4
  %v11 = vunpack.i.l.bf16 %v10
  %v13 = vunpack.i.h.bf16 %v10
  $region1: #{_lambda_.6} parent=0
    #allocation7 [shape = 'u8[40960]{0}', space=vmem, size = 0xa000, scoped, tag = 'output window, operand 0']
    loop: start=0, step=1, limit=4
    $region2: #{_lambda_.6} parent=1 // loop_pre_header
      _
    $region3: #{_lambda_.6} parent=1 // loop_header
      %s16 = sphi 0, %s20
      %p17 = scmp.ge.s32.totalorder %s16, 4
      %s26 = sphi 0, %s28
      %s29 = sphi 0, %s26
      %s30 = sphi 0, %s29
      %s46 = sphi 0, %s30
      %s50 = sphi 0, %s50
      %s52 = sphi 0, %s50
      %s53 = sphi 0, %s52
      %s67 = sphi 0, %s53
      %s71 = sphi 0, %s71
      %s73 = sphi 0, %s71
      %s74 = sphi 0, %s73
      %s88 = sphi 0, %s74
      %s92 = sphi 0, %s92
      %s94 = sphi 0, %s92
      %s95 = sphi 0, %s94
      %s109 = sphi 0, %s95
      %s115 = sphi 0, %s117
      %s118 = sphi 0, %s115
      %s119 = sphi 0, %s118
      %s135 = sphi 0, %s119
    $region4: #{_lambda_.6} parent=1 // loop_header_branch
      %19 = sbr.rel (%p17) target = $region8
    $region5: #{_lambda_.6} parent=1 // loop_body
      %s21 = ssub.s32 %s16, 1
      %s22 = ssub.s32 %s16, 2
      %s23 = sadd.s32 %s16, 1
      %s24 = ssub.s32 %s16, %s23
      %p25 = scmp.eq.s32.totalorder %s24, 0
      %s27 = sadd.s32 %s26, 1
      %s28 = scalar_select %p25, %s26, %s27
      %p31 = pneg %p25
      %p32 = scmp.eq.s32.totalorder %s16, 1
      %p33 = por %p31, %p32
      %p34 = scmp.ne.s32.totalorder %s26, %s29
      %p35 = scmp.eq.s32.totalorder %s16, 0
      %p36 = por %p34, %p35
      %p37 = scmp.ne.s32.totalorder %s26, %s29
      %p38 = scmp.eq.s32.totalorder %s21, 1
      %p39 = por %p37, %p38
      %p40 = scmp.ne.s32.totalorder %s29, %s30
      %p41 = scmp.eq.s32.totalorder %s21, 0
      %p42 = por %p40, %p41
      %p43 = scmp.ne.s32.totalorder %s29, %s30
      %p44 = scmp.eq.s32.totalorder %s22, 1
      %p45 = por %p43, %p44
      %p47 = scmp.ne.s32.totalorder %s30, %s46
      %p48 = scmp.eq.s32.totalorder %s22, 0
      %p49 = por %p47, %p48
      %s51 = sadd.s32 %s50, 1
      %p54 = scmp.eq.s32.totalorder %s16, 1
      %p55 = scmp.ne.s32.totalorder %s50, %s52
      %p56 = scmp.eq.s32.totalorder %s16, 0
      %p57 = por %p55, %p56
      %p58 = scmp.ne.s32.totalorder %s50, %s52
      %p59 = scmp.eq.s32.totalorder %s21, 1
      %p60 = por %p58, %p59
      %p61 = scmp.ne.s32.totalorder %s52, %s53
      %p62 = scmp.eq.s32.totalorder %s21, 0
      %p63 = por %p61, %p62
      %p64 = scmp.ne.s32.totalorder %s52, %s53
      %p65 = scmp.eq.s32.totalorder %s22, 1
      %p66 = por %p64, %p65
      %p68 = scmp.ne.s32.totalorder %s53, %s67
      %p69 = scmp.eq.s32.totalorder %s22, 0
      %p70 = por %p68, %p69
      %s72 = sadd.s32 %s71, 1
      %p75 = scmp.eq.s32.totalorder %s16, 1
      %p76 = scmp.ne.s32.totalorder %s71, %s73
      %p77 = scmp.eq.s32.totalorder %s16, 0
      %p78 = por %p76, %p77
      %p79 = scmp.ne.s32.totalorder %s71, %s73
      %p80 = scmp.eq.s32.totalorder %s21, 1
      %p81 = por %p79, %p80
      %p82 = scmp.ne.s32.totalorder %s73, %s74
      %p83 = scmp.eq.s32.totalorder %s21, 0
      %p84 = por %p82, %p83
      %p85 = scmp.ne.s32.totalorder %s73, %s74
      %p86 = scmp.eq.s32.totalorder %s22, 1
      %p87 = por %p85, %p86
      %p89 = scmp.ne.s32.totalorder %s74, %s88
      %p90 = scmp.eq.s32.totalorder %s22, 0
      %p91 = por %p89, %p90
      %s93 = sadd.s32 %s92, 1
      %p96 = scmp.eq.s32.totalorder %s16, 1
      %p97 = scmp.ne.s32.totalorder %s92, %s94
      %p98 = scmp.eq.s32.totalorder %s16, 0
      %p99 = por %p97, %p98
      %p100 = scmp.ne.s32.totalorder %s92, %s94
      %p101 = scmp.eq.s32.totalorder %s21, 1
      %p102 = por %p100, %p101
      %p103 = scmp.ne.s32.totalorder %s94, %s95
      %p104 = scmp.eq.s32.totalorder %s21, 0
      %p105 = por %p103, %p104
      %p106 = scmp.ne.s32.totalorder %s94, %s95
      %p107 = scmp.eq.s32.totalorder %s22, 1
      %p108 = por %p106, %p107
      %p110 = scmp.ne.s32.totalorder %s95, %s109
      %p111 = scmp.eq.s32.totalorder %s22, 0
      %p112 = por %p110, %p111
      %s113 = ssub.s32 %s16, %s23
      %p114 = scmp.eq.s32.totalorder %s113, 0
      %s116 = sadd.s32 %s115, 1
      %s117 = scalar_select %p114, %s115, %s116
      %p120 = pneg %p114
      %p121 = scmp.eq.s32.totalorder %s16, 1
      %p122 = por %p120, %p121
      %p123 = scmp.ne.s32.totalorder %s115, %s118
      %p124 = scmp.eq.s32.totalorder %s16, 0
      %p125 = por %p123, %p124
      %p126 = scmp.ne.s32.totalorder %s115, %s118
      %p127 = scmp.eq.s32.totalorder %s21, 1
      %p128 = por %p126, %p127
      %p129 = scmp.ne.s32.totalorder %s118, %s119
      %p130 = scmp.eq.s32.totalorder %s21, 0
      %p131 = por %p129, %p130
      %p132 = scmp.ne.s32.totalorder %s118, %s119
      %p133 = scmp.eq.s32.totalorder %s22, 1
      %p134 = por %p132, %p133
      %p136 = scmp.ne.s32.totalorder %s119, %s135
      %p137 = scmp.eq.s32.totalorder %s22, 0
      %p138 = por %p136, %p137
      %p139 = scmp.le.s32.totalorder 1, %s16
      %p140 = scmp.lt.s32.totalorder %s16, 3
      %p141 = pnand %p139, %p140
      %p142 = pneg %p141
      // Predicated region
      $region9: #{_lambda_.6} parent=5 // pred_check
        _
      $region10: #{_lambda_.6} parent=5 // pred_check_branch
        %144 = sbr.rel (%p141) target = $region12
      $region11: #{_lambda_.6} parent=5 // pred_region
        %s145 = ssub.s32 %s16, 1
        // Predicated region
        $region13: #{_lambda_.6} parent=11 // pred_check
          %p146 = pneg %p63
        $region14: #{_lambda_.6} parent=11 // pred_check_branch
          %148 = sbr.rel (%p146) target = $region16
        $region15: #{_lambda_.6} parent=11 // pred_region
          _
        $region16: #{_lambda_.6} parent=11 // pred_fallthru
          _
        // Predicated region
        $region17: #{_lambda_.6} parent=11 // pred_check
          %p149 = pneg %p84
        $region18: #{_lambda_.6} parent=11 // pred_check_branch
          %151 = sbr.rel (%p149) target = $region20
        $region19: #{_lambda_.6} parent=11 // pred_region
          _
        $region20: #{_lambda_.6} parent=11 // pred_fallthru
          _
        // Predicated region
        $region21: #{_lambda_.6} parent=11 // pred_check
          %p152 = pneg %p105
        $region22: #{_lambda_.6} parent=11 // pred_check_branch
          %154 = sbr.rel (%p152) target = $region24
        $region23: #{_lambda_.6} parent=11 // pred_region
          _
        $region24: #{_lambda_.6} parent=11 // pred_fallthru
          _
      $region12: #{_lambda_.6} parent=5 // pred_fallthru
        _
      %p155 = scmp.lt.s32.totalorder %s16, 2
      // Predicated region
      $region25: #{_lambda_.6} parent=5 // pred_check
        %p156 = pneg %p155
      $region26: #{_lambda_.6} parent=5 // pred_check_branch
        %158 = sbr.rel (%p156) target = $region28
      $region27: #{_lambda_.6} parent=5 // pred_region
        // Predicated region
        $region29: #{_lambda_.6} parent=27 // pred_check
          %p159 = pneg %p36
        $region30: #{_lambda_.6} parent=27 // pred_check_branch
          %161 = sbr.rel (%p159) target = $region32
        $region31: #{_lambda_.6} parent=27 // pred_region
          %s162 = smul.u32 5, %s16
          %s163 = ssub.s32 9, %s162
          %p164 = scmp.lt.s32.totalorder %s163, 5
          %s165 = scalar_select %p164, %s163, 5
          %s166 = smul.u32 4, %s165
          %p167 = scmp.lt.s32.totalorder %s162, 8
          %s168 = scalar_select %p167, %s162, 8
          %s169 = smul.addr %s168, 4
          %s170 = scalar_lea.vmem %s3, %s169
          %s171 = smul.u32 5, %s16
          %s172 = ssub.s32 9, %s171
          %p173 = scmp.lt.s32.totalorder %s172, 5
          %s174 = scalar_select %p173, %s172, 5
          %s175 = smul.u32 4, %s174
        $region32: #{_lambda_.6} parent=27 // pred_fallthru
          _
      $region28: #{_lambda_.6} parent=5 // pred_fallthru
        _
      %p176 = scmp.le.s32.totalorder 1, %s16
      %p177 = scmp.lt.s32.totalorder %s16, 3
      %p178 = pnand %p176, %p177
      %p179 = pneg %p178
      // Predicated region
      $region33: #{_lambda_.6} parent=5 // pred_check
        _
      $region34: #{_lambda_.6} parent=5 // pred_check_branch
        %181 = sbr.rel (%p178) target = $region36
      $region35: #{_lambda_.6} parent=5 // pred_region
        #allocation8 [shape = 'u8[10240]{0}', space=vmem, size = 0x2800, dematerialized = true, scoped, tag = 'FusionAdapter Buffer %fusion.1 = bf16[72,32]{1,0:T(8,128)(2,1)} fusion(%param_3.25, %param_4), kind=kLoop, calls=%fused_computation.26.clone, metadata={op_name="jit(<lambda>)/jit(_pad)/pad" stack_frame_id=18}']
        %s182 = ssub.s32 %s16, 1
        %s183 = smul.u32 5, %s21
        %s184 = ssub.s32 9, %s183
        %p185 = scmp.lt.s32.totalorder %s184, 5
        %s186 = scalar_select %p185, %s184, 5
        %s187 = smul.u32 4, %s186
        %p188 = scmp.lt.s32.totalorder %s183, 8
        %s189 = scalar_select %p188, %s183, 8
        %s190 = smul.addr %s189, 4
        %s191 = scalar_lea.vmem %s3, %s190
        %p192 = pneg %p42
        %p193 = pneg %p39
        %p194 = pneg %p63
        %p195 = pneg %p60
        %p196 = pneg %p84
        %p197 = pneg %p81
        %p198 = pneg %p105
        %p199 = pneg %p102
        %p200 = pneg %p131
        %p201 = pneg %p128
        %s202 = sand.u32 %s118, 1
        %s203 = sand.u32 %s118, 1
        %s204 = smul.addr %s203, 40
        %s205 = scalar_lea.vmem [#allocation7], %s204
        %s206 = smul.u32 5, %s21
        %s207 = ssub.s32 9, %s206
        %p208 = scmp.lt.s32.totalorder %s207, 5
        %s209 = scalar_select %p208, %s207, 5
        %s210 = smul.u32 4, %s209
        %p211 = scmp.lt.s32.totalorder %s206, 8
        %s212 = scalar_select %p211, %s206, 8
        %s213 = smul.addr %s212, 4
        %s214 = scalar_lea.vmem %s3, %s213
        %s215 = smul.u32 5, %s21
        %s216 = ssub.s32 9, %s215
        %p217 = scmp.lt.s32.totalorder %s216, 5
        %s218 = scalar_select %p217, %s216, 5
        %s219 = smul.u32 4, %s218
        %s220 = smul.u32 5, %s21
        %s221 = ssub.s32 9, %s220
        %p222 = scmp.lt.s32.totalorder %s221, 5
        %s223 = scalar_select %p222, %s221, 5
        %s224 = smul.u32 8, %s223
        %s226 = sor.u32 255, 127
        %s227 = sand.u32 %s226, 85
        %s228 = sshrl.u32 %s227, 1
        %s229 = sor.u32 %s227, %s228
        %s230 = sand.u32 51, %s229
        %s231 = sshrl.u32 %s230, 2
        %s232 = sor.u32 %s230, %s231
        %s233 = sand.u32 15, %s232
        %v234 = vld [vmem:[%s214] sm:%s233]
        %v235 = vunpack.c.l.bf16 %v234
        %v236 = vunpack.c.h.bf16 %v234
        %v237 = vlaneseq
        %v238 = vand.u32 %v237, 127
        %vm240 = vcmp.lt.s32.totalorder %v238, 25
        %v241 = vsel %vm240, %v235, %v11
        %v242 = vpack.c.bf16 0.0, %v241
        %s244 = ssub.s32 16, 1
        %245 = vst [vmem:[#allocation8] sm:%s244] %v242
        %s246 = scalar_lea.vmem %s214, 4
        %s248 = sor.u32 255, 127
        %s249 = sand.u32 %s248, 85
        %s250 = sshrl.u32 %s249, 1
        %s251 = sor.u32 %s249, %s250
        %s252 = sand.u32 51, %s251
        %s253 = sshrl.u32 %s252, 2
        %s254 = sor.u32 %s252, %s253
        %s255 = sand.u32 15, %s254
        %v256 = vld [vmem:[%s246] sm:%s255]
        %v257 = vunpack.c.l.bf16 %v256
        %v258 = vunpack.c.h.bf16 %v256
        %v259 = vlaneseq
        %v260 = vand.u32 %v259, 127
        %vm262 = vcmp.lt.s32.totalorder %v260, 25
        %v263 = vsel %vm262, %v257, %v11
        %s264 = scalar_lea.vmem [#allocation8], 4
        %v265 = vpack.c.bf16 0.0, %v263
        %s267 = ssub.s32 16, 1
        %268 = vst [vmem:[%s264] sm:%s267] %v265
        %s269 = scalar_lea.vmem %s214, 8
        %s271 = sor.u32 255, 127
        %s272 = sand.u32 %s271, 85
        %s273 = sshrl.u32 %s272, 1
        %s274 = sor.u32 %s272, %s273
        %s275 = sand.u32 51, %s274
        %s276 = sshrl.u32 %s275, 2
        %s277 = sor.u32 %s275, %s276
        %s278 = sand.u32 15, %s277
        %v279 = vld [vmem:[%s269] sm:%s278]
        %v280 = vunpack.c.l.bf16 %v279
        %v281 = vunpack.c.h.bf16 %v279
        %v282 = vlaneseq
        %v283 = vand.u32 %v282, 127
        %vm285 = vcmp.lt.s32.totalorder %v283, 25
        %v286 = vsel %vm285, %v280, %v11
        %s287 = scalar_lea.vmem [#allocation8], 8
        %v288 = vpack.c.bf16 0.0, %v286
        %s290 = ssub.s32 16, 1
        %291 = vst [vmem:[%s287] sm:%s290] %v288
        %s292 = scalar_lea.vmem %s214, 12
        %s294 = sor.u32 255, 127
        %s295 = sand.u32 %s294, 85
        %s296 = sshrl.u32 %s295, 1
        %s297 = sor.u32 %s295, %s296
        %s298 = sand.u32 51, %s297
        %s299 = sshrl.u32 %s298, 2
        %s300 = sor.u32 %s298, %s299
        %s301 = sand.u32 15, %s300
        %v302 = vld [vmem:[%s292] sm:%s301]
        %v303 = vunpack.c.l.bf16 %v302
        %v304 = vunpack.c.h.bf16 %v302
        %v305 = vlaneseq
        %v306 = vand.u32 %v305, 127
        %vm308 = vcmp.lt.s32.totalorder %v306, 25
        %v309 = vsel %vm308, %v303, %v11
        %s310 = scalar_lea.vmem [#allocation8], 12
        %v311 = vpack.c.bf16 0.0, %v309
        %s313 = ssub.s32 16, 1
        %314 = vst [vmem:[%s310] sm:%s313] %v311
        %s315 = scalar_lea.vmem %s214, 16
        %s316 = sadd.s32 %s215, 4
        %s317 = ssub.s32 8, %s316
        %p318 = scmp.lt.s32.totalorder %s317, 0
        %s319 = scalar_select %p318, 0, 255
        %s320 = sshrl.u32 %s319, 1
        %s321 = sor.u32 %s319, %s320
        %s322 = sand.u32 %s321, 85
        %s323 = sshrl.u32 %s322, 1
        %s324 = sor.u32 %s322, %s323
        %s325 = sand.u32 51, %s324
        %s326 = sshrl.u32 %s325, 2
        %s327 = sor.u32 %s325, %s326
        %s328 = sand.u32 15, %s327
        %v329 = vld [vmem:[%s315] sm:%s328]
        %v330 = vunpack.c.l.bf16 %v329
        %v331 = vunpack.c.h.bf16 %v329
        %s332 = sadd.s32 %s215, 4
        %s333 = ssub.s32 8, %s332
        %v334 = vstv %s333
        %vm335 = vcmp.lt.s32.totalorder %v334, 0
        %v336 = vsel %vm335, %v11, %v330
        %v337 = vlaneseq
        %v338 = vand.u32 %v337, 127
        %vm340 = vcmp.lt.s32.totalorder %v338, 25
        %v341 = vsel %vm340, %v336, %v11
        %s342 = scalar_lea.vmem [#allocation8], 16
        %v343 = vpack.c.bf16 0.0, %v341
        %s345 = ssub.s32 16, 1
        %346 = vst [vmem:[%s342] sm:%s345] %v343
        %v348 = vld [vmem:[#allocation8] sm:$0xf]
        %v349 = vld [vmem:[#allocation8 + $0x4] sm:$0xf]
        %v350 = vld [vmem:[#allocation8 + $0x8] sm:$0xf]
        %v351 = vld [vmem:[#allocation8 + $0xc] sm:$0xf]
        %v352 = vld [vmem:[#allocation8 + $0x10] sm:$0xf]
        %v353 = vld [vmem:[%s0] sm:$0xf]
        %v354 = vld [vmem:[%s0 + $0x4] sm:$0xf]
        %v355 = vld [vmem:[%s0 + $0x8] sm:$0xf]
        %v356 = vld [vmem:[%s0 + $0xc] sm:$0xf]
        %v362 = vunpack.c.l.b16 %v348
        %v363 = vunpack.c.l.b16 %v349
        %v364 = vunpack.c.l.b16 %v350
        %v365 = vunpack.c.l.b16 %v351
        %v366 = vunpack.c.l.b16 %v352
        %v367 = vpack.c.b16 %v363, %v362
        %v368 = vpack.c.b16 %v365, %v364
        %v369 = vpack.c.b16 %v366, %v366
        %v374 = vunpack.c.l.b16 %v353
        %v375 = vunpack.c.l.b16 %v354
        %v376 = vunpack.c.l.b16 %v355
        %v377 = vunpack.c.l.b16 %v356
        %v378 = vpack.c.b16 %v375, %v374
        %v379 = vpack.c.b16 %v377, %v376
        %vm382 = vcmask 261120
        %v384 = vsel %vm382, %v367, 0
        %v387 = vsel %vm382, %v368, 0
        %v390 = vsel %vm382, %v369, 0
        %392 = vmatpush.bf16.msra.mxu0 0
        %393 = vmatpush.bf16.msra.mxu0 0
        %394 = vmatpush.bf16.msra.mxu0 0
        %395 = vmatpush.bf16.msra.mxu0 0
        %396 = vmatpush.bf16.msra.mxu0 0
        %397 = vmatpush.bf16.msra.mxu0 0
        %398 = vmatpush.bf16.msra.mxu0 %v379
        %399 = vmatpush.bf16.msra.mxu0 %v378
        %400 = vmatmul.bf16.gmra.mxu0 %v384
        %v401 = vpop.f32.mrf.mxu0
        %v402 = vadd.f32 0.0, %v401
        %v403 = vpop.f32.mrf.mxu0
        %v404 = vadd.f32 0.0, %v403
        %405 = vmatmul.bf16.gmra.mxu0 %v387
        %v406 = vpop.f32.mrf.mxu0
        %v407 = vadd.f32 0.0, %v406
        %v408 = vpop.f32.mrf.mxu0
        %v409 = vadd.f32 0.0, %v408
        %410 = vmatmul.bf16.gmra.mxu0 %v390
        %v411 = vpop.f32.mrf.mxu0
        %v412 = vadd.f32 0.0, %v411
        %v413 = vpop.f32.mrf.mxu0
        %414 = vdwg.mxu0
        %v415 = vld [vmem:[%s1] sm:$0x1]
        %v417 = vperm.slane %v415, 0
        %v419 = vmul.f32 %v402, %v417
        %v420 = vmul.f32 %v404, %v417
        %v421 = vmul.f32 %v407, %v417
        %v422 = vmul.f32 %v409, %v417
        %v423 = vmul.f32 %v412, %v417
        %v424 = vld [vmem:[%s2] sm:$0x1]
        %v426 = vperm.slane %v424, 0
        %v428 = vadd.f32 %v419, %v426
        %v429 = vadd.f32 %v420, %v426
        %v430 = vadd.f32 %v421, %v426
        %v431 = vadd.f32 %v422, %v426
        %v432 = vadd.f32 %v423, %v426
        %v433 = vmax.f32 %v428, 0.0
        %v434 = vmax.f32 %v429, 0.0
        %v435 = vmax.f32 %v430, 0.0
        %v436 = vmax.f32 %v431, 0.0
        %v437 = vmax.f32 %v432, 0.0
        %438 = vst [vmem:[%s205] sm:$0xff] %v433
        %439 = vst [vmem:[%s205 + $0x8] sm:$0xff] %v434
        %440 = vst [vmem:[%s205 + $0x10] sm:$0xff] %v435
        %441 = vst [vmem:[%s205 + $0x18] sm:$0xff] %v436
        %442 = vst [vmem:[%s205 + $0x20] sm:$0xff] %v437
        %s443 = sand.u32 %s118, 1
        %s444 = sand.u32 %s118, 1
        %s445 = smul.addr %s444, 40
        %s446 = scalar_lea.vmem [#allocation7], %s445
        // Predicated region
        $region37: #{_lambda_.6} parent=35 // pred_check
          %p447 = pneg %p128
        $region38: #{_lambda_.6} parent=35 // pred_check_branch
          %449 = sbr.rel (%p447) target = $region40
        $region39: #{_lambda_.6} parent=35 // pred_region
          %s450 = smul.u32 5, %s21
          %s451 = ssub.s32 9, %s450
          %p452 = scmp.lt.s32.totalorder %s451, 5
          %s453 = scalar_select %p452, %s451, 5
          %s454 = smul.u32 8, %s453
          %p455 = scmp.ne.s32.totalorder 0, %s454
          %s456 = smul.addr %s450, 8
          %s457 = scalar_lea.vmem %s5, %s456
          // Predicated region
          $region41: #{_lambda_.6} parent=39 // pred_check
            %p458 = pneg %p455
          $region42: #{_lambda_.6} parent=39 // pred_check_branch
            %460 = sbr.rel (%p458) target = $region44
          $region43: #{_lambda_.6} parent=39 // pred_region
            // Predicated region
            $region45: #{_lambda_.6} parent=43 // pred_check
              _
            $region46: #{_lambda_.6} parent=43 // pred_check_branch
              %462 = sbr.rel (0) target = $region48
            $region47: #{_lambda_.6} parent=43 // pred_region
              // Predicated region
              $region67: #{_lambda_.6} parent=47 // pred_check
                _
              $region68: #{_lambda_.6} parent=47 // pred_check_branch
                %521 = sbr.rel (0) target = $region70
              $region69: #{_lambda_.6} parent=47 // pred_region
                %s522 = sdiv.u32.pop %s453, 5
                %s523 = srem.u32.pop %s453, 5
                // While loop
                $region71: #{_lambda_.6} parent=69 // loop_pre_header
                  _
                $region72: #{_lambda_.6} parent=69 // loop_header
                  %s525 = sphi 0, %s527
                  %p526 = scmp.ge.s32.totalorder %s525, %s522
                  %s530 = sphi 0, %s545
                  %s531 = sphi %s446, %s548
                  %s532 = sphi %s457, %s549
                $region73: #{_lambda_.6} parent=69 // loop_header_branch
                  %529 = sbr.rel (%p526) target = $region77
                $region74: #{_lambda_.6} parent=69 // loop_body
                  %v533 = vld [vmem:[%s531] sm:$0xff]
                  %534 = vst [vmem:[%s532] sm:$0xff] %v533
                  %v535 = vld [vmem:[%s531 + $0x8] sm:$0xff]
                  %536 = vst [vmem:[%s532 + $0x8] sm:$0xff] %v535
                  %v537 = vld [vmem:[%s531 + $0x10] sm:$0xff]
                  %538 = vst [vmem:[%s532 + $0x10] sm:$0xff] %v537
                  %v539 = vld [vmem:[%s531 + $0x18] sm:$0xff]
                  %540 = vst [vmem:[%s532 + $0x18] sm:$0xff] %v539
                  %v541 = vld [vmem:[%s531 + $0x20] sm:$0xff]
                  %542 = vst [vmem:[%s532 + $0x20] sm:$0xff] %v541
                  %s543 = sadd.s32 1, %s530
                  %p544 = scmp.ge.s32.totalorder %s543, %s522
                  %s545 = scalar_select %p544, 0, %s543
                  %s546 = smul.u32 %s545, 40
                  %s547 = smul.u32 %s545, 40
                  %s548 = scalar_lea.vmem %s446, %s546 [#allocation7]
                  %s549 = scalar_lea.vmem %s457, %s547
                $region75: #{_lambda_.6} parent=69 // loop_footer
                  %s527 = sadd.s32 %s525, 1
                $region76: #{_lambda_.6} parent=69 // loop_footer_branch
                  %524 = sbr.rel target = $region72
                $region77: #{_lambda_.6} parent=69 // loop_exit
                  _
                %s550 = sdiv.u32.pop %s453, 5
                %s551 = srem.u32.pop %s453, 5
                %s552 = smul.u32 %s550, 5
                %s553 = smul.u32 8, %s552
                %s554 = scalar_lea.vmem %s446, %s553 [#allocation7]
                %s555 = smul.u32 8, %s552
                %s556 = scalar_lea.vmem %s457, %s555
                // While loop
                $region78: #{_lambda_.6} parent=69 // loop_pre_header
                  _
                $region79: #{_lambda_.6} parent=69 // loop_header
                  %s558 = sphi 0, %s560
                  %p559 = scmp.ge.s32.totalorder %s558, %s551
                  %s563 = sphi 0, %s570
                  %s564 = sphi %s554, %s573
                  %s565 = sphi %s556, %s574
                $region80: #{_lambda_.6} parent=69 // loop_header_branch
                  %562 = sbr.rel (%p559) target = $region84
                $region81: #{_lambda_.6} parent=69 // loop_body
                  %v566 = vld [vmem:[%s564] sm:$0xff]
                  %567 = vst [vmem:[%s565] sm:$0xff] %v566
                  %s568 = sadd.s32 1, %s563
                  %p569 = scmp.ge.s32.totalorder %s568, %s551
                  %s570 = scalar_select %p569, 0, %s568
                  %s571 = smul.u32 %s570, 8
                  %s572 = smul.u32 %s570, 8
                  %s573 = scalar_lea.vmem %s554, %s571 [#allocation7]
                  %s574 = scalar_lea.vmem %s556, %s572
                $region82: #{_lambda_.6} parent=69 // loop_footer
                  %s560 = sadd.s32 %s558, 1
                $region83: #{_lambda_.6} parent=69 // loop_footer_branch
                  %557 = sbr.rel target = $region79
                $region84: #{_lambda_.6} parent=69 // loop_exit
                  _
              $region70: #{_lambda_.6} parent=47 // pred_fallthru
                _
              // Predicated region
              $region85: #{_lambda_.6} parent=47 // pred_check
                _
              $region86: #{_lambda_.6} parent=47 // pred_check_branch
                %576 = sbr.rel target = $region88
              $region87: #{_lambda_.6} parent=47 // pred_region
                _
              $region88: #{_lambda_.6} parent=47 // pred_fallthru
                _
            $region48: #{_lambda_.6} parent=43 // pred_fallthru
              _
            // Predicated region
            $region49: #{_lambda_.6} parent=43 // pred_check
              _
            $region50: #{_lambda_.6} parent=43 // pred_check_branch
              %464 = sbr.rel target = $region52
            $region51: #{_lambda_.6} parent=43 // pred_region
              %s466 = ssub.s32 256, 1
              %s467 = sdiv.u32.pop %s453, 5
              %s468 = srem.u32.pop %s453, 5
              // While loop
              $region53: #{_lambda_.6} parent=51 // loop_pre_header
                _
              $region54: #{_lambda_.6} parent=51 // loop_header
                %s470 = sphi 0, %s472
                %p471 = scmp.ge.s32.totalorder %s470, %s467
                %s475 = sphi 0, %s490
                %s476 = sphi %s446, %s493
                %s477 = sphi %s457, %s494
              $region55: #{_lambda_.6} parent=51 // loop_header_branch
                %474 = sbr.rel (%p471) target = $region59
              $region56: #{_lambda_.6} parent=51 // loop_body
                %v478 = vld [vmem:[%s476] sm:%s466]
                %479 = vst [vmem:[%s477] sm:%s466] %v478
                %v480 = vld [vmem:[%s476 + $0x8] sm:%s466]
                %481 = vst [vmem:[%s477 + $0x8] sm:%s466] %v480
                %v482 = vld [vmem:[%s476 + $0x10] sm:%s466]
                %483 = vst [vmem:[%s477 + $0x10] sm:%s466] %v482
                %v484 = vld [vmem:[%s476 + $0x18] sm:%s466]
                %485 = vst [vmem:[%s477 + $0x18] sm:%s466] %v484
                %v486 = vld [vmem:[%s476 + $0x20] sm:%s466]
                %487 = vst [vmem:[%s477 + $0x20] sm:%s466] %v486
                %s488 = sadd.s32 1, %s475
                %p489 = scmp.ge.s32.totalorder %s488, %s467
                %s490 = scalar_select %p489, 0, %s488
                %s491 = smul.u32 %s490, 40
                %s492 = smul.u32 %s490, 40
                %s493 = scalar_lea.vmem %s446, %s491 [#allocation7]
                %s494 = scalar_lea.vmem %s457, %s492
              $region57: #{_lambda_.6} parent=51 // loop_footer
                %s472 = sadd.s32 %s470, 1
              $region58: #{_lambda_.6} parent=51 // loop_footer_branch
                %469 = sbr.rel target = $region54
              $region59: #{_lambda_.6} parent=51 // loop_exit
                _
              %s495 = sdiv.u32.pop %s453, 5
              %s496 = srem.u32.pop %s453, 5
              %s497 = smul.u32 %s495, 5
              %s498 = smul.u32 8, %s497
              %s499 = scalar_lea.vmem %s446, %s498 [#allocation7]
              %s500 = smul.u32 8, %s497
              %s501 = scalar_lea.vmem %s457, %s500
              // While loop
              $region60: #{_lambda_.6} parent=51 // loop_pre_header
                _
              $region61: #{_lambda_.6} parent=51 // loop_header
                %s503 = sphi 0, %s505
                %p504 = scmp.ge.s32.totalorder %s503, %s496
                %s508 = sphi 0, %s515
                %s509 = sphi %s499, %s518
                %s510 = sphi %s501, %s519
              $region62: #{_lambda_.6} parent=51 // loop_header_branch
                %507 = sbr.rel (%p504) target = $region66
              $region63: #{_lambda_.6} parent=51 // loop_body
                %v511 = vld [vmem:[%s509] sm:%s466]
                %512 = vst [vmem:[%s510] sm:%s466] %v511
                %s513 = sadd.s32 1, %s508
                %p514 = scmp.ge.s32.totalorder %s513, %s496
                %s515 = scalar_select %p514, 0, %s513
                %s516 = smul.u32 %s515, 8
                %s517 = smul.u32 %s515, 8
                %s518 = scalar_lea.vmem %s499, %s516 [#allocation7]
                %s519 = scalar_lea.vmem %s501, %s517
              $region64: #{_lambda_.6} parent=51 // loop_footer
                %s505 = sadd.s32 %s503, 1
              $region65: #{_lambda_.6} parent=51 // loop_footer_branch
                %502 = sbr.rel target = $region61
              $region66: #{_lambda_.6} parent=51 // loop_exit
                _
            $region52: #{_lambda_.6} parent=43 // pred_fallthru
              _
          $region44: #{_lambda_.6} parent=39 // pred_fallthru
            _
          %577 = vnop
        $region40: #{_lambda_.6} parent=35 // pred_fallthru
          _
      $region36: #{_lambda_.6} parent=5 // pred_fallthru
        _
      %p578 = scmp.le.s32.totalorder 2, %s16
      // Predicated region
      $region89: #{_lambda_.6} parent=5 // pred_check
        %p579 = pneg %p578
      $region90: #{_lambda_.6} parent=5 // pred_check_branch
        %581 = sbr.rel (%p579) target = $region92
      $region91: #{_lambda_.6} parent=5 // pred_region
        %s582 = ssub.s32 %s16, 2
        // Predicated region
        $region93: #{_lambda_.6} parent=91 // pred_check
          %p583 = pneg %p134
        $region94: #{_lambda_.6} parent=91 // pred_check_branch
          %585 = sbr.rel (%p583) target = $region96
        $region95: #{_lambda_.6} parent=91 // pred_region
          %s586 = sand.u32 %s119, 1
          %s587 = sand.u32 %s119, 1
          %s588 = smul.addr %s587, 40
          %s589 = scalar_lea.vmem [#allocation7], %s588
        $region96: #{_lambda_.6} parent=91 // pred_fallthru
          _
      $region92: #{_lambda_.6} parent=5 // pred_fallthru
        _
    $region6: #{_lambda_.6} parent=1 // loop_footer
      %s20 = sadd.s32 1, %s16
    $region7: #{_lambda_.6} parent=1 // loop_footer_branch
      %15 = sbr.rel target = $region3
    $region8: #{_lambda_.6} parent=1 // loop_exit
      _

</llo_original>
